<compile_context>
chip_gen: v7x
topology: tpu7x:2x2x1
jax: 0.10.0
libtpu: 0.0.40
codegen_flags: <defaults>
</compile_context>

<pallas_src>
import jax
import jax.numpy as jnp
from jax import lax
from jax.experimental import pallas as pl
from jax.experimental.pallas import tpu as pltpu

# Module hyper-parameters (from Model.__init__ defaults)
N_OUT = 6            # n
N_CH = 12            # N  (conv channels)
R = 2
KSIZE = 100          # Conv1d kernel width (== flattened spatial size -> L_out = 1)
H1, H2 = 200, 100    # head hidden sizes
BN_EPS = 1e-5

PAD_CH = 128         # conv-output channels padded to a full lane group
PAD_OUT = 128        # kernel output lanes (sliced back to N_OUT in the wrapper)
NK = N_CH * KSIZE    # 1200

ROW_ALIGN = 16       # sublane alignment for the batch-tiled row dimension
MAX_TILE_B = 1024    # ~4.7 MiB f32 x per buffer -> ~20 MiB VMEM double-buffered


def _round_up(a, b):
    return (a + b - 1) // b * b


def _cdiv(a, b):
    return (a + b - 1) // b


def model_kernel(x_ref, wc_ref, bc_ref, w1_ref, b1_ref, w2_ref, b2_ref,
                 w3_ref, b3_ref, o_ref):
    # ---- Conv1d(N, N, 100) on a length-100 signal == one matmul -------------
    # x arrives as f32 (single 4 B/elem HBM read); the bf16 cast is done here,
    # hidden under the DMA, instead of as a separate wrapper-side XLA pass.
    xb = x_ref[...].astype(jnp.bfloat16)                  # (TILE_B, N*K) bf16
    y = jnp.dot(xb, wc_ref[...], preferred_element_type=jnp.float32)
    y = y + bc_ref[...]                                   # (TILE_B, 128) f32

    tb = y.shape[0]
    ch = lax.broadcasted_iota(jnp.int32, (tb, PAD_CH), 1)
    valid = ch < N_CH
    neg_inf = jnp.float32(-jnp.inf)
    pos_inf = jnp.float32(jnp.inf)
    y_hi = jnp.where(valid, y, neg_inf)                   # pad lanes ignored for max
    y_lo = jnp.where(valid, y, pos_inf)                   # pad lanes ignored for min

    # ---- torch.sort(dim=1, descending) + take first R and last R channels ---
    # Only the 2 largest / 2 smallest channel values survive the slice: tie-safe
    # max/min extraction with index masking instead of a full 12-way sort.
    top1 = jnp.max(y_hi, axis=1, keepdims=True)
    idx_t = jnp.min(jnp.where(y_hi == top1, ch, PAD_CH), axis=1, keepdims=True)
    top2 = jnp.max(jnp.where(ch == idx_t, neg_inf, y_hi), axis=1, keepdims=True)

    bot1 = jnp.min(y_lo, axis=1, keepdims=True)
    idx_b = jnp.min(jnp.where(y_lo == bot1, ch, PAD_CH), axis=1, keepdims=True)
    bot2 = jnp.min(jnp.where(ch == idx_b, pos_inf, y_lo), axis=1, keepdims=True)

    # ---- head ----------------------------------------------------------------
    # z = [top1, top2, bot2, bot1]; Linear(4, 200) as VPU broadcast FMAs instead
    # of a K=4 MXU matmul.  BatchNorm1d (eval, running stats) is folded into
    # w2/b2 and w3/b3 in the wrapper.
    # TODO(synk): Dropout(0.5) and training-mode BN batch stats are not implemented.
    h1 = (top1 * w1_ref[0:1, :] + top2 * w1_ref[1:2, :]
          + bot2 * w1_ref[2:3, :] + bot1 * w1_ref[3:4, :] + b1_ref[...])
    h1 = jnp.maximum(h1, 0.0)

    # bf16 head matmuls (f32 accumulation): keeps v5e's MXU off the critical
    # path; free filler under the x DMA on v6e/v7x.
    h2 = jnp.dot(h1.astype(jnp.bfloat16), w2_ref[...],
                 preferred_element_type=jnp.float32) + b2_ref[...]
    h2 = jnp.maximum(h2, 0.0)

    out = jnp.dot(h2.astype(jnp.bfloat16), w3_ref[...],
                  preferred_element_type=jnp.float32) + b3_ref[...]
    o_ref[...] = out.astype(o_ref.dtype)                  # bf16 store, lane-dense 128


def init_params(key):
    ks = jax.random.split(key, 8)

    def unif(k, shape, fan_in):
        bound = 1.0 / (fan_in ** 0.5)
        return jax.random.uniform(k, shape, jnp.float32, -bound, bound)

    return {
        "w_conv": unif(ks[0], (N_CH, N_CH, KSIZE), N_CH * KSIZE),  # (out, in, k)
        "b_conv": unif(ks[1], (N_CH,), N_CH * KSIZE),
        "w1": unif(ks[2], (2 * R, H1), 2 * R),                     # stored (in, out)
        "b1": unif(ks[3], (H1,), 2 * R),
        "w2": unif(ks[4], (H1, H2), H1),
        "b2": unif(ks[5], (H2,), H1),
        "w3": unif(ks[6], (H2, N_OUT), H2),
        "b3": unif(ks[7], (N_OUT,), H2),
        # BatchNorm1d affine params + running stats (PyTorch fresh-module defaults).
        "bn1_gamma": jnp.ones((H1,), jnp.float32),
        "bn1_beta": jnp.zeros((H1,), jnp.float32),
        "bn1_mean": jnp.zeros((H1,), jnp.float32),
        "bn1_var": jnp.ones((H1,), jnp.float32),
        "bn2_gamma": jnp.ones((H2,), jnp.float32),
        "bn2_beta": jnp.zeros((H2,), jnp.float32),
        "bn2_mean": jnp.zeros((H2,), jnp.float32),
        "bn2_var": jnp.ones((H2,), jnp.float32),
    }


@jax.jit
def model_forward(x, p):
    B, C, Hs, Ws = x.shape
    assert C == N_CH and Hs * Ws == KSIZE, "Flatten->Linear(2R,200) forces H*W==100"

    # x.view(B, N, -1) followed by a full-width Conv1d == one matmul on (B, N*K).
    # x stays f32: no wrapper-side convert or pad pass over the dominant tensor.
    x_flat = x.reshape(B, NK)

    # Batch tiling.  Ragged final blocks are handled by Pallas boundary masking
    # (input reads clamped, padded output rows discarded by the wrapper slice).
    b_al = _round_up(max(B, 1), ROW_ALIGN)
    if b_al >= 2 * MAX_TILE_B:
        tile_b = MAX_TILE_B                               # grid >= 2 automatically
    elif b_al >= 256:
        tile_b = _round_up(_cdiv(b_al, 2), ROW_ALIGN)     # 2 steps for v7x megacore
    else:
        tile_b = b_al                                     # tiny batch: single step
    num_tiles = _cdiv(b_al, tile_b)

    # Conv weight reshaped/transposed once, bf16, lane-padded 12 -> 128.
    wc_t = p["w_conv"].reshape(N_CH, NK).T.astype(jnp.bfloat16)       # (1200, 12)
    wc_t = jnp.pad(wc_t, ((0, 0), (0, PAD_CH - N_CH)))                # (1200, 128)
    bc = jnp.pad(p["b_conv"].reshape(1, N_CH), ((0, 0), (0, PAD_CH - N_CH)))

    # BatchNorm1d(eval) general fold: BN(r) = r*s + t with s = gamma/sqrt(var+eps),
    # t = beta - mean*s, folded through the following Linear's weight / bias.
    s1 = p["bn1_gamma"] / jnp.sqrt(p["bn1_var"] + BN_EPS)             # (200,)
    t1 = p["bn1_beta"] - p["bn1_mean"] * s1
    w2s = (p["w2"] * s1[:, None]).astype(jnp.bfloat16)                # (200, 100)
    b2s = (p["b2"] + t1 @ p["w2"]).reshape(1, H2)

    s2 = p["bn2_gamma"] / jnp.sqrt(p["bn2_var"] + BN_EPS)             # (100,)
    t2 = p["bn2_beta"] - p["bn2_mean"] * s2
    w3s = jnp.pad(p["w3"] * s2[:, None], ((0, 0), (0, PAD_OUT - N_OUT)))
    w3s = w3s.astype(jnp.bfloat16)                                    # (100, 128)
    b3s = jnp.pad((p["b3"] + t2 @ p["w3"]).reshape(1, N_OUT),
                  ((0, 0), (0, PAD_OUT - N_OUT)))

    const2 = lambda i: (0, 0)      # resident weights (constant block index)
    # NOTE: pl.Buffered(1) on the constant-index weight blocks would save ~0.6 MiB
    # of double-buffer VMEM; skipped, headroom is ample at this tile size.
    in_specs = [
        pl.BlockSpec((tile_b, NK), lambda i: (i, 0)),     # x: tiled + double-buffered
        pl.BlockSpec((NK, PAD_CH), const2),               # conv weight (bf16)
        pl.BlockSpec((1, PAD_CH), const2),                # conv bias
        pl.BlockSpec((2 * R, H1), const2),                # w1
        pl.BlockSpec((1, H1), const2),                    # b1
        pl.BlockSpec((H1, H2), const2),                   # w2 (BN-folded, bf16)
        pl.BlockSpec((1, H2), const2),                    # b2 (BN-folded)
        pl.BlockSpec((H2, PAD_OUT), const2),              # w3 (BN-folded, bf16)
        pl.BlockSpec((1, PAD_OUT), const2),               # b3 (BN-folded)
    ]

    out = pl.pallas_call(
        model_kernel,
        out_shape=jax.ShapeDtypeStruct((num_tiles * tile_b, PAD_OUT), jnp.bfloat16),
        grid=(num_tiles,),
        in_specs=in_specs,
        out_specs=pl.BlockSpec((tile_b, PAD_OUT), lambda i: (i, 0)),
        compiler_params=pltpu.CompilerParams(
            dimension_semantics=("parallel",),            # megacore sharding on v7x
            vmem_limit_bytes=32 * 1024 * 1024,            # fits all gens (v7x: 64 MiB)
        ),
    )(x_flat, wc_t, bc, p["w1"], p["b1"].reshape(1, H1),
      w2s, b2s, w3s, b3s)

    return out[:B, :N_OUT].astype(jnp.float32)


def reference(x, p):
    # Pure-JAX reference mirroring the kernel's bf16 matmul operands (true f32
    # PyTorch output differs from both by ~1e-2 relative due to the bf16 casts).
    B = x.shape[0]
    xf = x.reshape(B, NK).astype(jnp.bfloat16)
    wc = p["w_conv"].reshape(N_CH, NK).T.astype(jnp.bfloat16)
    y = jnp.dot(xf, wc, preferred_element_type=jnp.float32) + p["b_conv"]
    ys = jnp.sort(y, axis=1)[:, ::-1]                                # descending
    z = jnp.concatenate([ys[:, :R], ys[:, N_CH - R:]], axis=1)       # (B, 2R)

    def bn(h, g, b, m, v):
        return (h - m) * (g / jnp.sqrt(v + BN_EPS)) + b

    h1 = jnp.maximum(z @ p["w1"] + p["b1"], 0.0)
    h1 = bn(h1, p["bn1_gamma"], p["bn1_beta"], p["bn1_mean"], p["bn1_var"])
    h2 = jnp.dot(h1.astype(jnp.bfloat16), p["w2"].astype(jnp.bfloat16),
                 preferred_element_type=jnp.float32) + p["b2"]
    h2 = jnp.maximum(h2, 0.0)
    h2 = bn(h2, p["bn2_gamma"], p["bn2_beta"], p["bn2_mean"], p["bn2_var"])
    out = jnp.dot(h2.astype(jnp.bfloat16), p["w3"].astype(jnp.bfloat16),
                  preferred_element_type=jnp.float32) + p["b3"]
    return out


if __name__ == "__main__":
    key = jax.random.PRNGKey(0)
    kx, kp = jax.random.split(key)

    B, Hs, Ws = 2, 10, 10                     # H*W must equal KSIZE (=100)
    x = jax.random.normal(kx, (B, N_CH, Hs, Ws), jnp.float32)
    params = init_params(kp)

    out = model_forward(x, params)
    out = jax.block_until_ready(out)

    ref = reference(x, params)
    assert out.shape == (B, N_OUT)
    max_err = jnp.max(jnp.abs(out - ref))
    assert jnp.allclose(out, ref, atol=2e-2, rtol=2e-2), (max_err, out, ref)
    print("KERNEL_OK")
</pallas_src>

<mosaic_0001>
module attributes {stable_mosaic.version = 11 : i64} {
  func.func @model_kernel(%arg0: i32, %arg1: memref<16x1200xf32, #tpu.memory_space<vmem>>, %arg2: memref<1200x128xbf16, #tpu.memory_space<vmem>>, %arg3: memref<1x128xf32, #tpu.memory_space<vmem>>, %arg4: memref<4x200xf32, #tpu.memory_space<vmem>>, %arg5: memref<1x200xf32, #tpu.memory_space<vmem>>, %arg6: memref<200x100xbf16, #tpu.memory_space<vmem>>, %arg7: memref<1x100xf32, #tpu.memory_space<vmem>>, %arg8: memref<100x128xbf16, #tpu.memory_space<vmem>>, %arg9: memref<1x128xf32, #tpu.memory_space<vmem>>, %arg10: memref<16x128xbf16, #tpu.memory_space<vmem>>) attributes {dimension_semantics = [#tpu.dimension_semantics<parallel>], iteration_bounds = array<i64: 1>, scalar_prefetch = 0 : i64, scratch_operands = 0 : i64, tpu.core_type = #tpu.core_type<tc>, window_params = [{transform_indices = @transform_0, window_bounds = array<i64: 16, 1200>}, {pipeline_mode = #tpu.pipeline_mode<synchronous>, transform_indices = @transform_1, window_bounds = array<i64: 1200, 128>}, {pipeline_mode = #tpu.pipeline_mode<synchronous>, transform_indices = @transform_2, window_bounds = array<i64: 1, 128>}, {pipeline_mode = #tpu.pipeline_mode<synchronous>, transform_indices = @transform_3, window_bounds = array<i64: 4, 200>}, {pipeline_mode = #tpu.pipeline_mode<synchronous>, transform_indices = @transform_4, window_bounds = array<i64: 1, 200>}, {pipeline_mode = #tpu.pipeline_mode<synchronous>, transform_indices = @transform_5, window_bounds = array<i64: 200, 100>}, {pipeline_mode = #tpu.pipeline_mode<synchronous>, transform_indices = @transform_6, window_bounds = array<i64: 1, 100>}, {pipeline_mode = #tpu.pipeline_mode<synchronous>, transform_indices = @transform_7, window_bounds = array<i64: 100, 128>}, {pipeline_mode = #tpu.pipeline_mode<synchronous>, transform_indices = @transform_8, window_bounds = array<i64: 1, 128>}, {transform_indices = @transform_9, window_bounds = array<i64: 16, 128>}]} {
    %c0 = arith.constant 0 : index
    %c0_0 = arith.constant 0 : index
    %0 = vector.load %arg1[%c0, %c0_0] : memref<16x1200xf32, #tpu.memory_space<vmem>>, vector<16x1200xf32>
    %1 = arith.truncf %0 : vector<16x1200xf32> to vector<16x1200xbf16>
    %c0_1 = arith.constant 0 : index
    %c0_2 = arith.constant 0 : index
    %2 = vector.load %arg2[%c0_1, %c0_2] : memref<1200x128xbf16, #tpu.memory_space<vmem>>, vector<1200x128xbf16>
    %cst = arith.constant dense<0.000000e+00> : vector<16x128xf32>
    %3 = tpu.matmul %1, %2, %cst {dimension_numbers = #tpu.dot_dimension_numbers<[1], [0], [0], [1], [0, 0, 1, 1], [], []>} : vector<16x1200xbf16>, vector<1200x128xbf16>, vector<16x128xf32> -> vector<16x128xf32>
    %c0_3 = arith.constant 0 : index
    %c0_4 = arith.constant 0 : index
    %4 = vector.load %arg3[%c0_3, %c0_4] : memref<1x128xf32, #tpu.memory_space<vmem>>, vector<1x128xf32>
    %5 = vector.broadcast %4 : vector<1x128xf32> to vector<16x128xf32>
    %6 = arith.addf %3, %5 : vector<16x128xf32>
    %7 = tpu.iota {dimensions = array<i32: 1>} : vector<16x128xi32>
    %c12_i32 = arith.constant 12 : i32
    %8 = vector.broadcast %c12_i32 : i32 to vector<16x128xi32>
    %9 = arith.cmpi slt, %7, %8 : vector<16x128xi32>
    %cst_5 = arith.constant 0xFF800000 : f32
    %10 = vector.broadcast %cst_5 : f32 to vector<16x128xf32>
    %11 = arith.select %9, %6, %10 : vector<16x128xi1>, vector<16x128xf32>
    %cst_6 = arith.constant 0x7F800000 : f32
    %12 = vector.broadcast %cst_6 : f32 to vector<16x128xf32>
    %13 = arith.select %9, %6, %12 : vector<16x128xi1>, vector<16x128xf32>
    %cst_7 = arith.constant dense<0xFF800000> : vector<16xf32>
    %14 = vector.multi_reduction <maximumf>, %11, %cst_7 [1] : vector<16x128xf32> to vector<16xf32>
    %15 = vector.shape_cast %14 : vector<16xf32> to vector<16x1xf32>
    %16 = vector.broadcast %15 : vector<16x1xf32> to vector<16x128xf32>
    %17 = arith.cmpf oeq, %11, %16 : vector<16x128xf32>
    %c128_i32 = arith.constant 128 : i32
    %18 = vector.broadcast %c128_i32 : i32 to vector<16x128xi32>
    %19 = arith.select %17, %7, %18 : vector<16x128xi1>, vector<16x128xi32>
    %cst_8 = arith.constant dense<2147483647> : vector<16xi32>
    %20 = vector.multi_reduction <minsi>, %19, %cst_8 [1] : vector<16x128xi32> to vector<16xi32>
    %21 = vector.shape_cast %20 : vector<16xi32> to vector<16x1xi32>
    %22 = vector.broadcast %21 : vector<16x1xi32> to vector<16x128xi32>
    %23 = arith.cmpi eq, %7, %22 : vector<16x128xi32>
    %cst_9 = arith.constant 0xFF800000 : f32
    %24 = vector.broadcast %cst_9 : f32 to vector<16x128xf32>
    %25 = arith.select %23, %24, %11 : vector<16x128xi1>, vector<16x128xf32>
    %cst_10 = arith.constant dense<0xFF800000> : vector<16xf32>
    %26 = vector.multi_reduction <maximumf>, %25, %cst_10 [1] : vector<16x128xf32> to vector<16xf32>
    %27 = vector.shape_cast %26 : vector<16xf32> to vector<16x1xf32>
    %cst_11 = arith.constant dense<0x7F800000> : vector<16xf32>
    %28 = vector.multi_reduction <minimumf>, %13, %cst_11 [1] : vector<16x128xf32> to vector<16xf32>
    %29 = vector.shape_cast %28 : vector<16xf32> to vector<16x1xf32>
    %30 = vector.broadcast %29 : vector<16x1xf32> to vector<16x128xf32>
    %31 = arith.cmpf oeq, %13, %30 : vector<16x128xf32>
    %c128_i32_12 = arith.constant 128 : i32
    %32 = vector.broadcast %c128_i32_12 : i32 to vector<16x128xi32>
    %33 = arith.select %31, %7, %32 : vector<16x128xi1>, vector<16x128xi32>
    %cst_13 = arith.constant dense<2147483647> : vector<16xi32>
    %34 = vector.multi_reduction <minsi>, %33, %cst_13 [1] : vector<16x128xi32> to vector<16xi32>
    %35 = vector.shape_cast %34 : vector<16xi32> to vector<16x1xi32>
    %36 = vector.broadcast %35 : vector<16x1xi32> to vector<16x128xi32>
    %37 = arith.cmpi eq, %7, %36 : vector<16x128xi32>
    %cst_14 = arith.constant 0x7F800000 : f32
    %38 = vector.broadcast %cst_14 : f32 to vector<16x128xf32>
    %39 = arith.select %37, %38, %13 : vector<16x128xi1>, vector<16x128xf32>
    %cst_15 = arith.constant dense<0x7F800000> : vector<16xf32>
    %40 = vector.multi_reduction <minimumf>, %39, %cst_15 [1] : vector<16x128xf32> to vector<16xf32>
    %41 = vector.shape_cast %40 : vector<16xf32> to vector<16x1xf32>
    %c0_16 = arith.constant 0 : index
    %c0_17 = arith.constant 0 : index
    %42 = vector.load %arg4[%c0_16, %c0_17] : memref<4x200xf32, #tpu.memory_space<vmem>>, vector<1x200xf32>
    %43 = vector.broadcast %15 : vector<16x1xf32> to vector<16x200xf32>
    %44 = vector.broadcast %42 : vector<1x200xf32> to vector<16x200xf32>
    %45 = arith.mulf %43, %44 : vector<16x200xf32>
    %c1 = arith.constant 1 : index
    %c0_18 = arith.constant 0 : index
    %46 = vector.load %arg4[%c1, %c0_18] : memref<4x200xf32, #tpu.memory_space<vmem>>, vector<1x200xf32>
    %47 = vector.broadcast %27 : vector<16x1xf32> to vector<16x200xf32>
    %48 = vector.broadcast %46 : vector<1x200xf32> to vector<16x200xf32>
    %49 = arith.mulf %47, %48 : vector<16x200xf32>
    %50 = arith.addf %45, %49 : vector<16x200xf32>
    %c2 = arith.constant 2 : index
    %c0_19 = arith.constant 0 : index
    %51 = vector.load %arg4[%c2, %c0_19] : memref<4x200xf32, #tpu.memory_space<vmem>>, vector<1x200xf32>
    %52 = vector.broadcast %41 : vector<16x1xf32> to vector<16x200xf32>
    %53 = vector.broadcast %51 : vector<1x200xf32> to vector<16x200xf32>
    %54 = arith.mulf %52, %53 : vector<16x200xf32>
    %55 = arith.addf %50, %54 : vector<16x200xf32>
    %c3 = arith.constant 3 : index
    %c0_20 = arith.constant 0 : index
    %56 = vector.load %arg4[%c3, %c0_20] : memref<4x200xf32, #tpu.memory_space<vmem>>, vector<1x200xf32>
    %57 = vector.broadcast %29 : vector<16x1xf32> to vector<16x200xf32>
    %58 = vector.broadcast %56 : vector<1x200xf32> to vector<16x200xf32>
    %59 = arith.mulf %57, %58 : vector<16x200xf32>
    %60 = arith.addf %55, %59 : vector<16x200xf32>
    %c0_21 = arith.constant 0 : index
    %c0_22 = arith.constant 0 : index
    %61 = vector.load %arg5[%c0_21, %c0_22] : memref<1x200xf32, #tpu.memory_space<vmem>>, vector<1x200xf32>
    %62 = vector.broadcast %61 : vector<1x200xf32> to vector<16x200xf32>
    %63 = arith.addf %60, %62 : vector<16x200xf32>
    %cst_23 = arith.constant 0.000000e+00 : f32
    %64 = vector.broadcast %cst_23 : f32 to vector<16x200xf32>
    %65 = arith.maximumf %63, %64 : vector<16x200xf32>
    %66 = arith.truncf %65 : vector<16x200xf32> to vector<16x200xbf16>
    %c0_24 = arith.constant 0 : index
    %c0_25 = arith.constant 0 : index
    %67 = vector.load %arg6[%c0_24, %c0_25] : memref<200x100xbf16, #tpu.memory_space<vmem>>, vector<200x100xbf16>
    %cst_26 = arith.constant dense<0.000000e+00> : vector<16x100xf32>
    %68 = tpu.matmul %66, %67, %cst_26 {dimension_numbers = #tpu.dot_dimension_numbers<[1], [0], [0], [1], [0, 0, 1, 1], [], []>} : vector<16x200xbf16>, vector<200x100xbf16>, vector<16x100xf32> -> vector<16x100xf32>
    %c0_27 = arith.constant 0 : index
    %c0_28 = arith.constant 0 : index
    %69 = vector.load %arg7[%c0_27, %c0_28] : memref<1x100xf32, #tpu.memory_space<vmem>>, vector<1x100xf32>
    %70 = vector.broadcast %69 : vector<1x100xf32> to vector<16x100xf32>
    %71 = arith.addf %68, %70 : vector<16x100xf32>
    %cst_29 = arith.constant 0.000000e+00 : f32
    %72 = vector.broadcast %cst_29 : f32 to vector<16x100xf32>
    %73 = arith.maximumf %71, %72 : vector<16x100xf32>
    %74 = arith.truncf %73 : vector<16x100xf32> to vector<16x100xbf16>
    %c0_30 = arith.constant 0 : index
    %c0_31 = arith.constant 0 : index
    %75 = vector.load %arg8[%c0_30, %c0_31] : memref<100x128xbf16, #tpu.memory_space<vmem>>, vector<100x128xbf16>
    %cst_32 = arith.constant dense<0.000000e+00> : vector<16x128xf32>
    %76 = tpu.matmul %74, %75, %cst_32 {dimension_numbers = #tpu.dot_dimension_numbers<[1], [0], [0], [1], [0, 0, 1, 1], [], []>} : vector<16x100xbf16>, vector<100x128xbf16>, vector<16x128xf32> -> vector<16x128xf32>
    %c0_33 = arith.constant 0 : index
    %c0_34 = arith.constant 0 : index
    %77 = vector.load %arg9[%c0_33, %c0_34] : memref<1x128xf32, #tpu.memory_space<vmem>>, vector<1x128xf32>
    %78 = vector.broadcast %77 : vector<1x128xf32> to vector<16x128xf32>
    %79 = arith.addf %76, %78 : vector<16x128xf32>
    %80 = arith.truncf %79 : vector<16x128xf32> to vector<16x128xbf16>
    %c0_35 = arith.constant 0 : index
    %c0_36 = arith.constant 0 : index
    %81 = vector.load %arg10[%c0_35, %c0_36] : memref<16x128xbf16, #tpu.memory_space<vmem>>, vector<16x128xbf16>
    tpu.vector_store %arg10[%c0_35, %c0_36], %80 {strides = array<i32>} : memref<16x128xbf16, #tpu.memory_space<vmem>>, vector<16x128xbf16>,
    return
  }
  func.func @transform_0(%arg0: i32) -> (i32, i32) {
    %c0_i32 = arith.constant 0 : i32
    %c0_i32_0 = arith.constant 0 : i32
    return %arg0, %c0_i32 : i32, i32
  }
  func.func @transform_1(%arg0: i32) -> (i32, i32) {
    %c0_i32 = arith.constant 0 : i32
    %c0_i32_0 = arith.constant 0 : i32
    %c0_i32_1 = arith.constant 0 : i32
    return %c0_i32, %c0_i32_0 : i32, i32
  }
  func.func @transform_2(%arg0: i32) -> (i32, i32) {
    %c0_i32 = arith.constant 0 : i32
    %c0_i32_0 = arith.constant 0 : i32
    %c0_i32_1 = arith.constant 0 : i32
    return %c0_i32, %c0_i32_0 : i32, i32
  }
  func.func @transform_3(%arg0: i32) -> (i32, i32) {
    %c0_i32 = arith.constant 0 : i32
    %c0_i32_0 = arith.constant 0 : i32
    %c0_i32_1 = arith.constant 0 : i32
    return %c0_i32, %c0_i32_0 : i32, i32
  }
  func.func @transform_4(%arg0: i32) -> (i32, i32) {
    %c0_i32 = arith.constant 0 : i32
    %c0_i32_0 = arith.constant 0 : i32
    %c0_i32_1 = arith.constant 0 : i32
    return %c0_i32, %c0_i32_0 : i32, i32
  }
  func.func @transform_5(%arg0: i32) -> (i32, i32) {
    %c0_i32 = arith.constant 0 : i32
    %c0_i32_0 = arith.constant 0 : i32
    %c0_i32_1 = arith.constant 0 : i32
    return %c0_i32, %c0_i32_0 : i32, i32
  }
  func.func @transform_6(%arg0: i32) -> (i32, i32) {
    %c0_i32 = arith.constant 0 : i32
    %c0_i32_0 = arith.constant 0 : i32
    %c0_i32_1 = arith.constant 0 : i32
    return %c0_i32, %c0_i32_0 : i32, i32
  }
  func.func @transform_7(%arg0: i32) -> (i32, i32) {
    %c0_i32 = arith.constant 0 : i32
    %c0_i32_0 = arith.constant 0 : i32
    %c0_i32_1 = arith.constant 0 : i32
    return %c0_i32, %c0_i32_0 : i32, i32
  }
  func.func @transform_8(%arg0: i32) -> (i32, i32) {
    %c0_i32 = arith.constant 0 : i32
    %c0_i32_0 = arith.constant 0 : i32
    %c0_i32_1 = arith.constant 0 : i32
    return %c0_i32, %c0_i32_0 : i32, i32
  }
  func.func @transform_9(%arg0: i32) -> (i32, i32) {
    %c0_i32 = arith.constant 0 : i32
    %c0_i32_0 = arith.constant 0 : i32
    return %arg0, %c0_i32 : i32, i32
  }
}

</mosaic_0001>

<llo_original>
// kernel: model_forward.1
$region0: #{model_forward.1}
  #allocation0 [shape = 'u32[]', space=smem, size = 0x4, offset = 0x4, fixed_abs, tag = 'smem constant byte address 0x4 - core index']
  #allocation1 [shape = 'u32[144,128]{1,0:T(1,128)}', space=vmem, size = 0x12000, scoped, tag = 'internal scratch']
  %s0 = inlined_call_operand.vmem [shape: f32[2,1200], index: 0, kind: input, shape index: {}]
  %s1 = inlined_call_operand.vmem [shape: bf16[1200,128], index: 1, kind: input, shape index: {}]
  %s2 = inlined_call_operand.vmem [shape: f32[1,128], index: 2, kind: input, shape index: {}]
  %s3 = inlined_call_operand.vmem [shape: f32[4,200], index: 3, kind: input, shape index: {}]
  %s4 = inlined_call_operand.vmem [shape: f32[1,200], index: 4, kind: input, shape index: {}]
  %s5 = inlined_call_operand.vmem [shape: bf16[200,100], index: 5, kind: input, shape index: {}]
  %s6 = inlined_call_operand.vmem [shape: f32[1,100], index: 6, kind: input, shape index: {}]
  %s7 = inlined_call_operand.vmem [shape: bf16[100,128], index: 7, kind: input, shape index: {}]
  %s8 = inlined_call_operand.vmem [shape: f32[1,128], index: 8, kind: input, shape index: {}]
  %s9 = inlined_call_operand.vmem [shape: bf16[16,128], index: 9, kind: output, shape index: {}]
  %s10 = sld [smem:[#allocation0]]
  $region46: #{model_forward.1} parent=0
    _
  %s12 = ssub.s32 1, %s10
  %s13 = scalar_select 0, %s12, %s10
  // Predicated region
  $region2: #{model_forward.1} parent=0 // pred_check
    _
  $region3: #{model_forward.1} parent=0 // pred_check_branch
    %15 = sbr.rel (0) target = $region5
  $region4: #{model_forward.1} parent=0 // pred_region
    _
  $region5: #{model_forward.1} parent=0 // pred_fallthru
    _
  // Predicated region
  $region6: #{model_forward.1} parent=0 // pred_check
    _
  $region7: #{model_forward.1} parent=0 // pred_check_branch
    %17 = sbr.rel (0) target = $region9
  $region8: #{model_forward.1} parent=0 // pred_region
    _
  $region9: #{model_forward.1} parent=0 // pred_fallthru
    _
  // Predicated region
  $region10: #{model_forward.1} parent=0 // pred_check
    _
  $region11: #{model_forward.1} parent=0 // pred_check_branch
    %19 = sbr.rel (0) target = $region13
  $region12: #{model_forward.1} parent=0 // pred_region
    _
  $region13: #{model_forward.1} parent=0 // pred_fallthru
    _
  // Predicated region
  $region14: #{model_forward.1} parent=0 // pred_check
    _
  $region15: #{model_forward.1} parent=0 // pred_check_branch
    %21 = sbr.rel (0) target = $region17
  $region16: #{model_forward.1} parent=0 // pred_region
    _
  $region17: #{model_forward.1} parent=0 // pred_fallthru
    _
  // Predicated region
  $region18: #{model_forward.1} parent=0 // pred_check
    _
  $region19: #{model_forward.1} parent=0 // pred_check_branch
    %23 = sbr.rel (0) target = $region21
  $region20: #{model_forward.1} parent=0 // pred_region
    _
  $region21: #{model_forward.1} parent=0 // pred_fallthru
    _
  // Predicated region
  $region22: #{model_forward.1} parent=0 // pred_check
    _
  $region23: #{model_forward.1} parent=0 // pred_check_branch
    %25 = sbr.rel (0) target = $region25
  $region24: #{model_forward.1} parent=0 // pred_region
    _
  $region25: #{model_forward.1} parent=0 // pred_fallthru
    _
  // Predicated region
  $region26: #{model_forward.1} parent=0 // pred_check
    _
  $region27: #{model_forward.1} parent=0 // pred_check_branch
    %27 = sbr.rel (0) target = $region29
  $region28: #{model_forward.1} parent=0 // pred_region
    _
  $region29: #{model_forward.1} parent=0 // pred_fallthru
    _
  // Predicated region
  $region30: #{model_forward.1} parent=0 // pred_check
    _
  $region31: #{model_forward.1} parent=0 // pred_check_branch
    %29 = sbr.rel (0) target = $region33
  $region32: #{model_forward.1} parent=0 // pred_region
    _
  $region33: #{model_forward.1} parent=0 // pred_fallthru
    _
  // Predicated region
  $region34: #{model_forward.1} parent=0 // pred_check
    _
  $region35: #{model_forward.1} parent=0 // pred_check_branch
    %31 = sbr.rel (0) target = $region37
  $region36: #{model_forward.1} parent=0 // pred_region
    _
  $region37: #{model_forward.1} parent=0 // pred_fallthru
    _
  %v33 = vld [vmem:[%s0] sm:$0xff]
  %v34 = vld [vmem:[%s0 + $0x8] sm:$0xff]
  %v35 = vld [vmem:[%s0 + $0x10] sm:$0xf]
  %v36 = vld [vmem:[%s0 + $0x14] sm:$0xff]
  %v37 = vld [vmem:[%s0 + $0x1c] sm:$0xff]
  %v38 = vld [vmem:[%s0 + $0x24] sm:$0xf]
  %v39 = vld [vmem:[%s0 + $0x28] sm:$0xff]
  %v40 = vld [vmem:[%s0 + $0x30] sm:$0xff]
  %v41 = vld [vmem:[%s0 + $0x38] sm:$0xf]
  %v42 = vld [vmem:[%s0 + $0x3c] sm:$0xff]
  %v43 = vld [vmem:[%s0 + $0x44] sm:$0xff]
  %v44 = vld [vmem:[%s0 + $0x4c] sm:$0xf]
  %v45 = vld [vmem:[%s0 + $0x50] sm:$0xff]
  %v46 = vld [vmem:[%s0 + $0x58] sm:$0xff]
  %v47 = vld [vmem:[%s0 + $0x60] sm:$0xf]
  %v48 = vld [vmem:[%s0 + $0x64] sm:$0xff]
  %v49 = vld [vmem:[%s0 + $0x6c] sm:$0xff]
  %v50 = vld [vmem:[%s0 + $0x74] sm:$0xf]
  %v51 = vld [vmem:[%s0 + $0x78] sm:$0xff]
  %v52 = vld [vmem:[%s0 + $0x80] sm:$0xff]
  %v53 = vld [vmem:[%s0 + $0x88] sm:$0xf]
  %v54 = vld [vmem:[%s0 + $0x8c] sm:$0xff]
  %v55 = vld [vmem:[%s0 + $0x94] sm:$0xff]
  %v56 = vld [vmem:[%s0 + $0x9c] sm:$0xf]
  %v81 = vcombine.low %v33, %v36
  %v82 = vcombine.high %v33, %v36
  %v83 = vcombine.low %v39, %v42
  %v84 = vcombine.high %v39, %v42
  %v86 = vunpack.c.l.s4 1983009808
  %v87 = vunpack.c.0.s8 %v86
  %v88 = vlaneseq
  %v89 = vshrl.u32 %v88, 7
  %v90 = vsub.s32 %v87, %v89
  %v91 = vrot.slane %v81, %v90
  %v93 = vunpack.c.l.s4 1983009808
  %v94 = vunpack.c.0.s8 %v93
  %v95 = vlaneseq
  %v96 = vshrl.u32 %v95, 7
  %v97 = vsub.s32 %v94, %v96
  %v98 = vrot.slane %v82, %v97
  %v100 = vunpack.c.l.s4 1983009808
  %v101 = vunpack.c.0.s8 %v100
  %v102 = vlaneseq
  %v103 = vshrl.u32 %v102, 7
  %v104 = vsub.s32 %v101, %v103
  %v105 = vrot.slane %v83, %v104
  %v107 = vunpack.c.l.s4 1983009808
  %v108 = vunpack.c.0.s8 %v107
  %v109 = vlaneseq
  %v110 = vshrl.u32 %v109, 7
  %v111 = vsub.s32 %v108, %v110
  %v112 = vrot.slane %v84, %v111
  %v113 = vcombine.low %v91, %v105
  %v114 = vcombine.high %v91, %v105
  %v115 = vcombine.low %v98, %v112
  %v116 = vcombine.high %v98, %v112
  %v117 = vcombine.low %v34, %v37
  %v118 = vcombine.high %v34, %v37
  %v119 = vcombine.low %v40, %v43
  %v120 = vcombine.high %v40, %v43
  %v122 = vunpack.c.l.s4 1983009808
  %v123 = vunpack.c.0.s8 %v122
  %v124 = vlaneseq
  %v125 = vshrl.u32 %v124, 7
  %v126 = vsub.s32 %v123, %v125
  %v127 = vrot.slane %v117, %v126
  %v129 = vunpack.c.l.s4 1983009808
  %v130 = vunpack.c.0.s8 %v129
  %v131 = vlaneseq
  %v132 = vshrl.u32 %v131, 7
  %v133 = vsub.s32 %v130, %v132
  %v134 = vrot.slane %v118, %v133
  %v136 = vunpack.c.l.s4 1983009808
  %v137 = vunpack.c.0.s8 %v136
  %v138 = vlaneseq
  %v139 = vshrl.u32 %v138, 7
  %v140 = vsub.s32 %v137, %v139
  %v141 = vrot.slane %v119, %v140
  %v143 = vunpack.c.l.s4 1983009808
  %v144 = vunpack.c.0.s8 %v143
  %v145 = vlaneseq
  %v146 = vshrl.u32 %v145, 7
  %v147 = vsub.s32 %v144, %v146
  %v148 = vrot.slane %v120, %v147
  %v149 = vcombine.low %v127, %v141
  %v150 = vcombine.high %v127, %v141
  %v151 = vcombine.low %v134, %v148
  %v152 = vcombine.high %v134, %v148
  %v153 = vcombine.low %v35, %v38
  %v154 = vcombine.low %v41, %v44
  %v156 = vunpack.c.l.s4 1983009808
  %v157 = vunpack.c.0.s8 %v156
  %v158 = vlaneseq
  %v159 = vshrl.u32 %v158, 7
  %v160 = vsub.s32 %v157, %v159
  %v161 = vrot.slane %v153, %v160
  %v163 = vunpack.c.l.s4 1983009808
  %v164 = vunpack.c.0.s8 %v163
  %v165 = vlaneseq
  %v166 = vshrl.u32 %v165, 7
  %v167 = vsub.s32 %v164, %v166
  %v168 = vrot.slane %v154, %v167
  %v169 = vcombine.low %v161, %v168
  %v170 = vcombine.high %v161, %v168
  %v171 = vcombine.low %v45, %v48
  %v172 = vcombine.high %v45, %v48
  %v173 = vcombine.low %v51, %v54
  %v174 = vcombine.high %v51, %v54
  %v176 = vunpack.c.l.s4 1983009808
  %v177 = vunpack.c.0.s8 %v176
  %v178 = vlaneseq
  %v179 = vshrl.u32 %v178, 7
  %v180 = vsub.s32 %v177, %v179
  %v181 = vrot.slane %v171, %v180
  %v183 = vunpack.c.l.s4 1983009808
  %v184 = vunpack.c.0.s8 %v183
  %v185 = vlaneseq
  %v186 = vshrl.u32 %v185, 7
  %v187 = vsub.s32 %v184, %v186
  %v188 = vrot.slane %v172, %v187
  %v190 = vunpack.c.l.s4 1983009808
  %v191 = vunpack.c.0.s8 %v190
  %v192 = vlaneseq
  %v193 = vshrl.u32 %v192, 7
  %v194 = vsub.s32 %v191, %v193
  %v195 = vrot.slane %v173, %v194
  %v197 = vunpack.c.l.s4 1983009808
  %v198 = vunpack.c.0.s8 %v197
  %v199 = vlaneseq
  %v200 = vshrl.u32 %v199, 7
  %v201 = vsub.s32 %v198, %v200
  %v202 = vrot.slane %v174, %v201
  %v203 = vcombine.low %v181, %v195
  %v204 = vcombine.high %v181, %v195
  %v205 = vcombine.low %v188, %v202
  %v206 = vcombine.high %v188, %v202
  %v207 = vcombine.low %v46, %v49
  %v208 = vcombine.high %v46, %v49
  %v209 = vcombine.low %v52, %v55
  %v210 = vcombine.high %v52, %v55
  %v212 = vunpack.c.l.s4 1983009808
  %v213 = vunpack.c.0.s8 %v212
  %v214 = vlaneseq
  %v215 = vshrl.u32 %v214, 7
  %v216 = vsub.s32 %v213, %v215
  %v217 = vrot.slane %v207, %v216
  %v219 = vunpack.c.l.s4 1983009808
  %v220 = vunpack.c.0.s8 %v219
  %v221 = vlaneseq
  %v222 = vshrl.u32 %v221, 7
  %v223 = vsub.s32 %v220, %v222
  %v224 = vrot.slane %v208, %v223
  %v226 = vunpack.c.l.s4 1983009808
  %v227 = vunpack.c.0.s8 %v226
  %v228 = vlaneseq
  %v229 = vshrl.u32 %v228, 7
  %v230 = vsub.s32 %v227, %v229
  %v231 = vrot.slane %v209, %v230
  %v233 = vunpack.c.l.s4 1983009808
  %v234 = vunpack.c.0.s8 %v233
  %v235 = vlaneseq
  %v236 = vshrl.u32 %v235, 7
  %v237 = vsub.s32 %v234, %v236
  %v238 = vrot.slane %v210, %v237
  %v239 = vcombine.low %v217, %v231
  %v240 = vcombine.high %v217, %v231
  %v241 = vcombine.low %v224, %v238
  %v242 = vcombine.high %v224, %v238
  %v243 = vcombine.low %v47, %v50
  %v244 = vcombine.low %v53, %v56
  %v246 = vunpack.c.l.s4 1983009808
  %v247 = vunpack.c.0.s8 %v246
  %v248 = vlaneseq
  %v249 = vshrl.u32 %v248, 7
  %v250 = vsub.s32 %v247, %v249
  %v251 = vrot.slane %v243, %v250
  %v253 = vunpack.c.l.s4 1983009808
  %v254 = vunpack.c.0.s8 %v253
  %v255 = vlaneseq
  %v256 = vshrl.u32 %v255, 7
  %v257 = vsub.s32 %v254, %v256
  %v258 = vrot.slane %v244, %v257
  %v259 = vcombine.low %v251, %v258
  %v260 = vcombine.high %v251, %v258
  %v281 = vpack.c.bf16 %v203, %v113
  %v282 = vpack.c.bf16 %v204, %v114
  %v283 = vpack.c.bf16 %v205, %v115
  %v284 = vpack.c.bf16 %v206, %v116
  %v285 = vpack.c.bf16 %v239, %v149
  %v286 = vpack.c.bf16 %v240, %v150
  %v287 = vpack.c.bf16 %v241, %v151
  %v288 = vpack.c.bf16 %v242, %v152
  %v289 = vpack.c.bf16 %v259, %v169
  %v290 = vpack.c.bf16 %v260, %v170
  %v291 = vld [vmem:[%s1] sm:$0xf]
  %v292 = vld [vmem:[%s1 + $0x4] sm:$0xf]
  %v293 = vld [vmem:[%s1 + $0x8] sm:$0xf]
  %v294 = vld [vmem:[%s1 + $0xc] sm:$0xf]
  %v295 = vld [vmem:[%s1 + $0x10] sm:$0xf]
  %v296 = vld [vmem:[%s1 + $0x14] sm:$0xf]
  %v297 = vld [vmem:[%s1 + $0x18] sm:$0xf]
  %v298 = vld [vmem:[%s1 + $0x1c] sm:$0xf]
  %v299 = vld [vmem:[%s1 + $0x20] sm:$0xf]
  %v300 = vld [vmem:[%s1 + $0x24] sm:$0xf]
  %v301 = vld [vmem:[%s1 + $0x28] sm:$0xf]
  %v302 = vld [vmem:[%s1 + $0x2c] sm:$0xf]
  %v303 = vld [vmem:[%s1 + $0x30] sm:$0xf]
  %v304 = vld [vmem:[%s1 + $0x34] sm:$0xf]
  %v305 = vld [vmem:[%s1 + $0x38] sm:$0xf]
  %v306 = vld [vmem:[%s1 + $0x3c] sm:$0xf]
  %v307 = vld [vmem:[%s1 + $0x40] sm:$0xf]
  %v308 = vld [vmem:[%s1 + $0x44] sm:$0xf]
  %v309 = vld [vmem:[%s1 + $0x48] sm:$0xf]
  %v310 = vld [vmem:[%s1 + $0x4c] sm:$0xf]
  %v311 = vld [vmem:[%s1 + $0x50] sm:$0xf]
  %v312 = vld [vmem:[%s1 + $0x54] sm:$0xf]
  %v313 = vld [vmem:[%s1 + $0x58] sm:$0xf]
  %v314 = vld [vmem:[%s1 + $0x5c] sm:$0xf]
  %v315 = vld [vmem:[%s1 + $0x60] sm:$0xf]
  %v316 = vld [vmem:[%s1 + $0x64] sm:$0xf]
  %v317 = vld [vmem:[%s1 + $0x68] sm:$0xf]
  %v318 = vld [vmem:[%s1 + $0x6c] sm:$0xf]
  %v319 = vld [vmem:[%s1 + $0x70] sm:$0xf]
  %v320 = vld [vmem:[%s1 + $0x74] sm:$0xf]
  %v321 = vld [vmem:[%s1 + $0x78] sm:$0xf]
  %v322 = vld [vmem:[%s1 + $0x7c] sm:$0xf]
  %v323 = vld [vmem:[%s1 + $0x80] sm:$0xf]
  %v324 = vld [vmem:[%s1 + $0x84] sm:$0xf]
  %v325 = vld [vmem:[%s1 + $0x88] sm:$0xf]
  %v326 = vld [vmem:[%s1 + $0x8c] sm:$0xf]
  %v327 = vld [vmem:[%s1 + $0x90] sm:$0xf]
  %v328 = vld [vmem:[%s1 + $0x94] sm:$0xf]
  %v329 = vld [vmem:[%s1 + $0x98] sm:$0xf]
  %v330 = vld [vmem:[%s1 + $0x9c] sm:$0xf]
  %v331 = vld [vmem:[%s1 + $0xa0] sm:$0xf]
  %v332 = vld [vmem:[%s1 + $0xa4] sm:$0xf]
  %v333 = vld [vmem:[%s1 + $0xa8] sm:$0xf]
  %v334 = vld [vmem:[%s1 + $0xac] sm:$0xf]
  %v335 = vld [vmem:[%s1 + $0xb0] sm:$0xf]
  %v336 = vld [vmem:[%s1 + $0xb4] sm:$0xf]
  %v337 = vld [vmem:[%s1 + $0xb8] sm:$0xf]
  %v338 = vld [vmem:[%s1 + $0xbc] sm:$0xf]
  %v339 = vld [vmem:[%s1 + $0xc0] sm:$0xf]
  %v340 = vld [vmem:[%s1 + $0xc4] sm:$0xf]
  %v341 = vld [vmem:[%s1 + $0xc8] sm:$0xf]
  %v342 = vld [vmem:[%s1 + $0xcc] sm:$0xf]
  %v343 = vld [vmem:[%s1 + $0xd0] sm:$0xf]
  %v344 = vld [vmem:[%s1 + $0xd4] sm:$0xf]
  %v345 = vld [vmem:[%s1 + $0xd8] sm:$0xf]
  %v346 = vld [vmem:[%s1 + $0xdc] sm:$0xf]
  %v347 = vld [vmem:[%s1 + $0xe0] sm:$0xf]
  %v348 = vld [vmem:[%s1 + $0xe4] sm:$0xf]
  %v349 = vld [vmem:[%s1 + $0xe8] sm:$0xf]
  %v350 = vld [vmem:[%s1 + $0xec] sm:$0xf]
  %v351 = vld [vmem:[%s1 + $0xf0] sm:$0xf]
  %v352 = vld [vmem:[%s1 + $0xf4] sm:$0xf]
  %v353 = vld [vmem:[%s1 + $0xf8] sm:$0xf]
  %v354 = vld [vmem:[%s1 + $0xfc] sm:$0xf]
  %v355 = vld [vmem:[%s1 + $0x100] sm:$0xf]
  %v356 = vld [vmem:[%s1 + $0x104] sm:$0xf]
  %v357 = vld [vmem:[%s1 + $0x108] sm:$0xf]
  %v358 = vld [vmem:[%s1 + $0x10c] sm:$0xf]
  %v359 = vld [vmem:[%s1 + $0x110] sm:$0xf]
  %v360 = vld [vmem:[%s1 + $0x114] sm:$0xf]
  %v361 = vld [vmem:[%s1 + $0x118] sm:$0xf]
  %v362 = vld [vmem:[%s1 + $0x11c] sm:$0xf]
  %v363 = vld [vmem:[%s1 + $0x120] sm:$0xf]
  %v364 = vld [vmem:[%s1 + $0x124] sm:$0xf]
  %v365 = vld [vmem:[%s1 + $0x128] sm:$0xf]
  %v366 = vld [vmem:[%s1 + $0x12c] sm:$0xf]
  %v367 = vld [vmem:[%s1 + $0x130] sm:$0xf]
  %v368 = vld [vmem:[%s1 + $0x134] sm:$0xf]
  %v369 = vld [vmem:[%s1 + $0x138] sm:$0xf]
  %v370 = vld [vmem:[%s1 + $0x13c] sm:$0xf]
  %v371 = vld [vmem:[%s1 + $0x140] sm:$0xf]
  %v372 = vld [vmem:[%s1 + $0x144] sm:$0xf]
  %v373 = vld [vmem:[%s1 + $0x148] sm:$0xf]
  %v374 = vld [vmem:[%s1 + $0x14c] sm:$0xf]
  %v375 = vld [vmem:[%s1 + $0x150] sm:$0xf]
  %v376 = vld [vmem:[%s1 + $0x154] sm:$0xf]
  %v377 = vld [vmem:[%s1 + $0x158] sm:$0xf]
  %v378 = vld [vmem:[%s1 + $0x15c] sm:$0xf]
  %v379 = vld [vmem:[%s1 + $0x160] sm:$0xf]
  %v380 = vld [vmem:[%s1 + $0x164] sm:$0xf]
  %v381 = vld [vmem:[%s1 + $0x168] sm:$0xf]
  %v382 = vld [vmem:[%s1 + $0x16c] sm:$0xf]
  %v383 = vld [vmem:[%s1 + $0x170] sm:$0xf]
  %v384 = vld [vmem:[%s1 + $0x174] sm:$0xf]
  %v385 = vld [vmem:[%s1 + $0x178] sm:$0xf]
  %v386 = vld [vmem:[%s1 + $0x17c] sm:$0xf]
  %v387 = vld [vmem:[%s1 + $0x180] sm:$0xf]
  %v388 = vld [vmem:[%s1 + $0x184] sm:$0xf]
  %v389 = vld [vmem:[%s1 + $0x188] sm:$0xf]
  %v390 = vld [vmem:[%s1 + $0x18c] sm:$0xf]
  %v391 = vld [vmem:[%s1 + $0x190] sm:$0xf]
  %v392 = vld [vmem:[%s1 + $0x194] sm:$0xf]
  %v393 = vld [vmem:[%s1 + $0x198] sm:$0xf]
  %v394 = vld [vmem:[%s1 + $0x19c] sm:$0xf]
  %v395 = vld [vmem:[%s1 + $0x1a0] sm:$0xf]
  %v396 = vld [vmem:[%s1 + $0x1a4] sm:$0xf]
  %v397 = vld [vmem:[%s1 + $0x1a8] sm:$0xf]
  %v398 = vld [vmem:[%s1 + $0x1ac] sm:$0xf]
  %v399 = vld [vmem:[%s1 + $0x1b0] sm:$0xf]
  %v400 = vld [vmem:[%s1 + $0x1b4] sm:$0xf]
  %v401 = vld [vmem:[%s1 + $0x1b8] sm:$0xf]
  %v402 = vld [vmem:[%s1 + $0x1bc] sm:$0xf]
  %v403 = vld [vmem:[%s1 + $0x1c0] sm:$0xf]
  %v404 = vld [vmem:[%s1 + $0x1c4] sm:$0xf]
  %v405 = vld [vmem:[%s1 + $0x1c8] sm:$0xf]
  %v406 = vld [vmem:[%s1 + $0x1cc] sm:$0xf]
  %v407 = vld [vmem:[%s1 + $0x1d0] sm:$0xf]
  %v408 = vld [vmem:[%s1 + $0x1d4] sm:$0xf]
  %v409 = vld [vmem:[%s1 + $0x1d8] sm:$0xf]
  %v410 = vld [vmem:[%s1 + $0x1dc] sm:$0xf]
  %v411 = vld [vmem:[%s1 + $0x1e0] sm:$0xf]
  %v412 = vld [vmem:[%s1 + $0x1e4] sm:$0xf]
  %v413 = vld [vmem:[%s1 + $0x1e8] sm:$0xf]
  %v414 = vld [vmem:[%s1 + $0x1ec] sm:$0xf]
  %v415 = vld [vmem:[%s1 + $0x1f0] sm:$0xf]
  %v416 = vld [vmem:[%s1 + $0x1f4] sm:$0xf]
  %v417 = vld [vmem:[%s1 + $0x1f8] sm:$0xf]
  %v418 = vld [vmem:[%s1 + $0x1fc] sm:$0xf]
  %v419 = vld [vmem:[%s1 + $0x200] sm:$0xf]
  %v420 = vld [vmem:[%s1 + $0x204] sm:$0xf]
  %v421 = vld [vmem:[%s1 + $0x208] sm:$0xf]
  %v422 = vld [vmem:[%s1 + $0x20c] sm:$0xf]
  %v423 = vld [vmem:[%s1 + $0x210] sm:$0xf]
  %v424 = vld [vmem:[%s1 + $0x214] sm:$0xf]
  %v425 = vld [vmem:[%s1 + $0x218] sm:$0xf]
  %v426 = vld [vmem:[%s1 + $0x21c] sm:$0xf]
  %v427 = vld [vmem:[%s1 + $0x220] sm:$0xf]
  %v428 = vld [vmem:[%s1 + $0x224] sm:$0xf]
  %v429 = vld [vmem:[%s1 + $0x228] sm:$0xf]
  %v430 = vld [vmem:[%s1 + $0x22c] sm:$0xf]
  %v431 = vld [vmem:[%s1 + $0x230] sm:$0xf]
  %v432 = vld [vmem:[%s1 + $0x234] sm:$0xf]
  %v433 = vld [vmem:[%s1 + $0x238] sm:$0xf]
  %v434 = vld [vmem:[%s1 + $0x23c] sm:$0xf]
  %v435 = vld [vmem:[%s1 + $0x240] sm:$0xf]
  %v436 = vld [vmem:[%s1 + $0x244] sm:$0xf]
  %v437 = vld [vmem:[%s1 + $0x248] sm:$0xf]
  %v438 = vld [vmem:[%s1 + $0x24c] sm:$0xf]
  %v439 = vld [vmem:[%s1 + $0x250] sm:$0xf]
  %v440 = vld [vmem:[%s1 + $0x254] sm:$0xf]
  %v441 = vld [vmem:[%s2] sm:$0x1]
  %v443 = vlaneseq
  %v444 = vshrl.u32 %v443, 7
  %v445 = vsub.s32 0, %v444
  %v446 = vrot.slane %v441, %v445
  %v598 = vunpack.c.l.b16 %v291
  %v599 = vunpack.c.l.b16 %v292
  %v600 = vunpack.c.l.b16 %v293
  %v601 = vunpack.c.l.b16 %v294
  %v602 = vunpack.c.l.b16 %v295
  %v603 = vunpack.c.l.b16 %v296
  %v604 = vunpack.c.l.b16 %v297
  %v605 = vunpack.c.l.b16 %v298
  %v606 = vunpack.c.l.b16 %v299
  %v607 = vunpack.c.l.b16 %v300
  %v608 = vunpack.c.l.b16 %v301
  %v609 = vunpack.c.l.b16 %v302
  %v610 = vunpack.c.l.b16 %v303
  %v611 = vunpack.c.l.b16 %v304
  %v612 = vunpack.c.l.b16 %v305
  %v613 = vunpack.c.l.b16 %v306
  %v614 = vunpack.c.l.b16 %v307
  %v615 = vunpack.c.l.b16 %v308
  %v616 = vunpack.c.l.b16 %v309
  %v617 = vunpack.c.l.b16 %v310
  %v618 = vunpack.c.l.b16 %v311
  %v619 = vunpack.c.l.b16 %v312
  %v620 = vunpack.c.l.b16 %v313
  %v621 = vunpack.c.l.b16 %v314
  %v622 = vunpack.c.l.b16 %v315
  %v623 = vunpack.c.l.b16 %v316
  %v624 = vunpack.c.l.b16 %v317
  %v625 = vunpack.c.l.b16 %v318
  %v626 = vunpack.c.l.b16 %v319
  %v627 = vunpack.c.l.b16 %v320
  %v628 = vunpack.c.l.b16 %v321
  %v629 = vunpack.c.l.b16 %v322
  %v630 = vunpack.c.l.b16 %v323
  %v631 = vunpack.c.l.b16 %v324
  %v632 = vunpack.c.l.b16 %v325
  %v633 = vunpack.c.l.b16 %v326
  %v634 = vunpack.c.l.b16 %v327
  %v635 = vunpack.c.l.b16 %v328
  %v636 = vunpack.c.l.b16 %v329
  %v637 = vunpack.c.l.b16 %v330
  %v638 = vunpack.c.l.b16 %v331
  %v639 = vunpack.c.l.b16 %v332
  %v640 = vunpack.c.l.b16 %v333
  %v641 = vunpack.c.l.b16 %v334
  %v642 = vunpack.c.l.b16 %v335
  %v643 = vunpack.c.l.b16 %v336
  %v644 = vunpack.c.l.b16 %v337
  %v645 = vunpack.c.l.b16 %v338
  %v646 = vunpack.c.l.b16 %v339
  %v647 = vunpack.c.l.b16 %v340
  %v648 = vunpack.c.l.b16 %v341
  %v649 = vunpack.c.l.b16 %v342
  %v650 = vunpack.c.l.b16 %v343
  %v651 = vunpack.c.l.b16 %v344
  %v652 = vunpack.c.l.b16 %v345
  %v653 = vunpack.c.l.b16 %v346
  %v654 = vunpack.c.l.b16 %v347
  %v655 = vunpack.c.l.b16 %v348
  %v656 = vunpack.c.l.b16 %v349
  %v657 = vunpack.c.l.b16 %v350
  %v658 = vunpack.c.l.b16 %v351
  %v659 = vunpack.c.l.b16 %v352
  %v660 = vunpack.c.l.b16 %v353
  %v661 = vunpack.c.l.b16 %v354
  %v662 = vunpack.c.l.b16 %v355
  %v663 = vunpack.c.l.b16 %v356
  %v664 = vunpack.c.l.b16 %v357
  %v665 = vunpack.c.l.b16 %v358
  %v666 = vunpack.c.l.b16 %v359
  %v667 = vunpack.c.l.b16 %v360
  %v668 = vunpack.c.l.b16 %v361
  %v669 = vunpack.c.l.b16 %v362
  %v670 = vunpack.c.l.b16 %v363
  %v671 = vunpack.c.l.b16 %v364
  %v672 = vunpack.c.l.b16 %v365
  %v673 = vunpack.c.l.b16 %v366
  %v674 = vunpack.c.l.b16 %v367
  %v675 = vunpack.c.l.b16 %v368
  %v676 = vunpack.c.l.b16 %v369
  %v677 = vunpack.c.l.b16 %v370
  %v678 = vunpack.c.l.b16 %v371
  %v679 = vunpack.c.l.b16 %v372
  %v680 = vunpack.c.l.b16 %v373
  %v681 = vunpack.c.l.b16 %v374
  %v682 = vunpack.c.l.b16 %v375
  %v683 = vunpack.c.l.b16 %v376
  %v684 = vunpack.c.l.b16 %v377
  %v685 = vunpack.c.l.b16 %v378
  %v686 = vunpack.c.l.b16 %v379
  %v687 = vunpack.c.l.b16 %v380
  %v688 = vunpack.c.l.b16 %v381
  %v689 = vunpack.c.l.b16 %v382
  %v690 = vunpack.c.l.b16 %v383
  %v691 = vunpack.c.l.b16 %v384
  %v692 = vunpack.c.l.b16 %v385
  %v693 = vunpack.c.l.b16 %v386
  %v694 = vunpack.c.l.b16 %v387
  %v695 = vunpack.c.l.b16 %v388
  %v696 = vunpack.c.l.b16 %v389
  %v697 = vunpack.c.l.b16 %v390
  %v698 = vunpack.c.l.b16 %v391
  %v699 = vunpack.c.l.b16 %v392
  %v700 = vunpack.c.l.b16 %v393
  %v701 = vunpack.c.l.b16 %v394
  %v702 = vunpack.c.l.b16 %v395
  %v703 = vunpack.c.l.b16 %v396
  %v704 = vunpack.c.l.b16 %v397
  %v705 = vunpack.c.l.b16 %v398
  %v706 = vunpack.c.l.b16 %v399
  %v707 = vunpack.c.l.b16 %v400
  %v708 = vunpack.c.l.b16 %v401
  %v709 = vunpack.c.l.b16 %v402
  %v710 = vunpack.c.l.b16 %v403
  %v711 = vunpack.c.l.b16 %v404
  %v712 = vunpack.c.l.b16 %v405
  %v713 = vunpack.c.l.b16 %v406
  %v714 = vunpack.c.l.b16 %v407
  %v715 = vunpack.c.l.b16 %v408
  %v716 = vunpack.c.l.b16 %v409
  %v717 = vunpack.c.l.b16 %v410
  %v718 = vunpack.c.l.b16 %v411
  %v719 = vunpack.c.l.b16 %v412
  %v720 = vunpack.c.l.b16 %v413
  %v721 = vunpack.c.l.b16 %v414
  %v722 = vunpack.c.l.b16 %v415
  %v723 = vunpack.c.l.b16 %v416
  %v724 = vunpack.c.l.b16 %v417
  %v725 = vunpack.c.l.b16 %v418
  %v726 = vunpack.c.l.b16 %v419
  %v727 = vunpack.c.l.b16 %v420
  %v728 = vunpack.c.l.b16 %v421
  %v729 = vunpack.c.l.b16 %v422
  %v730 = vunpack.c.l.b16 %v423
  %v731 = vunpack.c.l.b16 %v424
  %v732 = vunpack.c.l.b16 %v425
  %v733 = vunpack.c.l.b16 %v426
  %v734 = vunpack.c.l.b16 %v427
  %v735 = vunpack.c.l.b16 %v428
  %v736 = vunpack.c.l.b16 %v429
  %v737 = vunpack.c.l.b16 %v430
  %v738 = vunpack.c.l.b16 %v431
  %v739 = vunpack.c.l.b16 %v432
  %v740 = vunpack.c.l.b16 %v433
  %v741 = vunpack.c.l.b16 %v434
  %v742 = vunpack.c.l.b16 %v435
  %v743 = vunpack.c.l.b16 %v436
  %v744 = vunpack.c.l.b16 %v437
  %v745 = vunpack.c.l.b16 %v438
  %v746 = vunpack.c.l.b16 %v439
  %v747 = vunpack.c.l.b16 %v440
  %v748 = vpack.c.b16 %v599, %v598
  %v749 = vpack.c.b16 %v601, %v600
  %v750 = vpack.c.b16 %v603, %v602
  %v751 = vpack.c.b16 %v605, %v604
  %v752 = vpack.c.b16 %v607, %v606
  %v753 = vpack.c.b16 %v609, %v608
  %v754 = vpack.c.b16 %v611, %v610
  %v755 = vpack.c.b16 %v613, %v612
  %v756 = vpack.c.b16 %v615, %v614
  %v757 = vpack.c.b16 %v617, %v616
  %v758 = vpack.c.b16 %v619, %v618
  %v759 = vpack.c.b16 %v621, %v620
  %v760 = vpack.c.b16 %v623, %v622
  %v761 = vpack.c.b16 %v625, %v624
  %v762 = vpack.c.b16 %v627, %v626
  %v763 = vpack.c.b16 %v629, %v628
  %v764 = vpack.c.b16 %v631, %v630
  %v765 = vpack.c.b16 %v633, %v632
  %v766 = vpack.c.b16 %v635, %v634
  %v767 = vpack.c.b16 %v637, %v636
  %v768 = vpack.c.b16 %v639, %v638
  %v769 = vpack.c.b16 %v641, %v640
  %v770 = vpack.c.b16 %v643, %v642
  %v771 = vpack.c.b16 %v645, %v644
  %v772 = vpack.c.b16 %v647, %v646
  %v773 = vpack.c.b16 %v649, %v648
  %v774 = vpack.c.b16 %v651, %v650
  %v775 = vpack.c.b16 %v653, %v652
  %v776 = vpack.c.b16 %v655, %v654
  %v777 = vpack.c.b16 %v657, %v656
  %v778 = vpack.c.b16 %v659, %v658
  %v779 = vpack.c.b16 %v661, %v660
  %v780 = vpack.c.b16 %v663, %v662
  %v781 = vpack.c.b16 %v665, %v664
  %v782 = vpack.c.b16 %v667, %v666
  %v783 = vpack.c.b16 %v669, %v668
  %v784 = vpack.c.b16 %v671, %v670
  %v785 = vpack.c.b16 %v673, %v672
  %v786 = vpack.c.b16 %v675, %v674
  %v787 = vpack.c.b16 %v677, %v676
  %v788 = vpack.c.b16 %v679, %v678
  %v789 = vpack.c.b16 %v681, %v680
  %v790 = vpack.c.b16 %v683, %v682
  %v791 = vpack.c.b16 %v685, %v684
  %v792 = vpack.c.b16 %v687, %v686
  %v793 = vpack.c.b16 %v689, %v688
  %v794 = vpack.c.b16 %v691, %v690
  %v795 = vpack.c.b16 %v693, %v692
  %v796 = vpack.c.b16 %v695, %v694
  %v797 = vpack.c.b16 %v697, %v696
  %v798 = vpack.c.b16 %v699, %v698
  %v799 = vpack.c.b16 %v701, %v700
  %v800 = vpack.c.b16 %v703, %v702
  %v801 = vpack.c.b16 %v705, %v704
  %v802 = vpack.c.b16 %v707, %v706
  %v803 = vpack.c.b16 %v709, %v708
  %v804 = vpack.c.b16 %v711, %v710
  %v805 = vpack.c.b16 %v713, %v712
  %v806 = vpack.c.b16 %v715, %v714
  %v807 = vpack.c.b16 %v717, %v716
  %v808 = vpack.c.b16 %v719, %v718
  %v809 = vpack.c.b16 %v721, %v720
  %v810 = vpack.c.b16 %v723, %v722
  %v811 = vpack.c.b16 %v725, %v724
  %v812 = vpack.c.b16 %v727, %v726
  %v813 = vpack.c.b16 %v729, %v728
  %v814 = vpack.c.b16 %v731, %v730
  %v815 = vpack.c.b16 %v733, %v732
  %v816 = vpack.c.b16 %v735, %v734
  %v817 = vpack.c.b16 %v737, %v736
  %v818 = vpack.c.b16 %v739, %v738
  %v819 = vpack.c.b16 %v741, %v740
  %v820 = vpack.c.b16 %v743, %v742
  %v821 = vpack.c.b16 %v745, %v744
  %v822 = vpack.c.b16 %v747, %v746
  %vm898 = vcmask 392192
  %v900 = vsel %vm898, %v290, 0
  %902 = vmatprep.subr.bf16.mxu0 0
  %903 = vmatpush1.bf16.msra.mxu0 %v748
  %904 = vmatprep.subr.bf16.mxu0 0
  %905 = vmatpush1.bf16.msra.mxu0 %v749
  %906 = vmatprep.subr.bf16.mxu0 0
  %907 = vmatpush1.bf16.msra.mxu0 %v750
  %908 = vmatprep.subr.bf16.mxu0 0
  %909 = vmatpush1.bf16.msra.mxu0 %v751
  %910 = vmatprep.subr.bf16.mxu0 0
  %911 = vmatpush1.bf16.msra.mxu0 %v752
  %912 = vmatprep.subr.bf16.mxu0 0
  %913 = vmatpush1.bf16.msra.mxu0 %v753
  %914 = vmatprep.subr.bf16.mxu0 0
  %915 = vmatpush1.bf16.msra.mxu0 %v754
  %916 = vmatprep.subr.bf16.mxu0 0
  %917 = vmatpush1.bf16.msra.mxu0 %v755
  %918 = vmatprep.subr.bf16.mxu0 0
  %919 = vmatpush1.bf16.msra.mxu0 %v756
  %920 = vmatprep.subr.bf16.mxu0 0
  %921 = vmatpush1.bf16.msra.mxu0 %v757
  %922 = vmatprep.subr.bf16.mxu0 0
  %923 = vmatpush1.bf16.msra.mxu0 %v758
  %924 = vmatprep.subr.bf16.mxu0 0
  %925 = vmatpush1.bf16.msra.mxu0 %v759
  %926 = vmatprep.subr.bf16.mxu0 0
  %927 = vmatpush1.bf16.msra.mxu0 %v760
  %928 = vmatprep.subr.bf16.mxu0 0
  %929 = vmatpush1.bf16.msra.mxu0 %v761
  %930 = vmatprep.subr.bf16.mxu0 0
  %931 = vmatpush1.bf16.msra.mxu0 %v762
  %932 = vmatprep.subr.bf16.mxu0 0
  %933 = vmatpush1.bf16.msra.mxu0 %v763
  %934 = vmatprep.mubr.bf16.mxu0 %v282
  %935 = vmatmul.mubr.bf16.gmra.mrb[0].mxu0 %v281
  %v936 = vpop.f32.mrb[0].mxu0
  %v937 = vadd.f32 %v446, %v936
  %v938 = vpop.f32.mrb[0].mxu0
  %v939 = vpop.f32.mrb[0].mxu0
  %v940 = vadd.f32 %v446, %v939
  %v941 = vpop.f32.mrb[0].mxu0
  %942 = vdwg.mxu0
  %943 = vmatprep.subr.bf16.mxu0 0
  %944 = vmatpush1.bf16.msra.mxu0 %v764
  %945 = vmatprep.subr.bf16.mxu0 0
  %946 = vmatpush1.bf16.msra.mxu0 %v765
  %947 = vmatprep.subr.bf16.mxu0 0
  %948 = vmatpush1.bf16.msra.mxu0 %v766
  %949 = vmatprep.subr.bf16.mxu0 0
  %950 = vmatpush1.bf16.msra.mxu0 %v767
  %951 = vmatprep.subr.bf16.mxu0 0
  %952 = vmatpush1.bf16.msra.mxu0 %v768
  %953 = vmatprep.subr.bf16.mxu0 0
  %954 = vmatpush1.bf16.msra.mxu0 %v769
  %955 = vmatprep.subr.bf16.mxu0 0
  %956 = vmatpush1.bf16.msra.mxu0 %v770
  %957 = vmatprep.subr.bf16.mxu0 0
  %958 = vmatpush1.bf16.msra.mxu0 %v771
  %959 = vmatprep.subr.bf16.mxu0 0
  %960 = vmatpush1.bf16.msra.mxu0 %v772
  %961 = vmatprep.subr.bf16.mxu0 0
  %962 = vmatpush1.bf16.msra.mxu0 %v773
  %963 = vmatprep.subr.bf16.mxu0 0
  %964 = vmatpush1.bf16.msra.mxu0 %v774
  %965 = vmatprep.subr.bf16.mxu0 0
  %966 = vmatpush1.bf16.msra.mxu0 %v775
  %967 = vmatprep.subr.bf16.mxu0 0
  %968 = vmatpush1.bf16.msra.mxu0 %v776
  %969 = vmatprep.subr.bf16.mxu0 0
  %970 = vmatpush1.bf16.msra.mxu0 %v777
  %971 = vmatprep.subr.bf16.mxu0 0
  %972 = vmatpush1.bf16.msra.mxu0 %v778
  %973 = vmatprep.subr.bf16.mxu0 0
  %974 = vmatpush1.bf16.msra.mxu0 %v779
  %975 = vmatprep.mubr.bf16.mxu0 %v284
  %976 = vmatmul.mubr.bf16.gmra.mrb[0].mxu0 %v283
  %v977 = vpop.f32.mrb[0].mxu0
  %v978 = vadd.f32 %v937, %v977
  %v979 = vpop.f32.mrb[0].mxu0
  %v980 = vpop.f32.mrb[0].mxu0
  %v981 = vadd.f32 %v940, %v980
  %v982 = vpop.f32.mrb[0].mxu0
  %983 = vdwg.mxu0
  %984 = vmatprep.subr.bf16.mxu0 0
  %985 = vmatpush1.bf16.msra.mxu0 %v780
  %986 = vmatprep.subr.bf16.mxu0 0
  %987 = vmatpush1.bf16.msra.mxu0 %v781
  %988 = vmatprep.subr.bf16.mxu0 0
  %989 = vmatpush1.bf16.msra.mxu0 %v782
  %990 = vmatprep.subr.bf16.mxu0 0
  %991 = vmatpush1.bf16.msra.mxu0 %v783
  %992 = vmatprep.subr.bf16.mxu0 0
  %993 = vmatpush1.bf16.msra.mxu0 %v784
  %994 = vmatprep.subr.bf16.mxu0 0
  %995 = vmatpush1.bf16.msra.mxu0 %v785
  %996 = vmatprep.subr.bf16.mxu0 0
  %997 = vmatpush1.bf16.msra.mxu0 %v786
  %998 = vmatprep.subr.bf16.mxu0 0
  %999 = vmatpush1.bf16.msra.mxu0 %v787
  %1000 = vmatprep.subr.bf16.mxu0 0
  %1001 = vmatpush1.bf16.msra.mxu0 %v788
  %1002 = vmatprep.subr.bf16.mxu0 0
  %1003 = vmatpush1.bf16.msra.mxu0 %v789
  %1004 = vmatprep.subr.bf16.mxu0 0
  %1005 = vmatpush1.bf16.msra.mxu0 %v790
  %1006 = vmatprep.subr.bf16.mxu0 0
  %1007 = vmatpush1.bf16.msra.mxu0 %v791
  %1008 = vmatprep.subr.bf16.mxu0 0
  %1009 = vmatpush1.bf16.msra.mxu0 %v792
  %1010 = vmatprep.subr.bf16.mxu0 0
  %1011 = vmatpush1.bf16.msra.mxu0 %v793
  %1012 = vmatprep.subr.bf16.mxu0 0
  %1013 = vmatpush1.bf16.msra.mxu0 %v794
  %1014 = vmatprep.subr.bf16.mxu0 0
  %1015 = vmatpush1.bf16.msra.mxu0 %v795
  %1016 = vmatprep.mubr.bf16.mxu0 %v286
  %1017 = vmatmul.mubr.bf16.gmra.mrb[0].mxu0 %v285
  %v1018 = vpop.f32.mrb[0].mxu0
  %v1019 = vadd.f32 %v978, %v1018
  %v1020 = vpop.f32.mrb[0].mxu0
  %v1021 = vpop.f32.mrb[0].mxu0
  %v1022 = vadd.f32 %v981, %v1021
  %v1023 = vpop.f32.mrb[0].mxu0
  %1024 = vdwg.mxu0
  %1025 = vmatprep.subr.bf16.mxu0 0
  %1026 = vmatpush1.bf16.msra.mxu0 %v796
  %1027 = vmatprep.subr.bf16.mxu0 0
  %1028 = vmatpush1.bf16.msra.mxu0 %v797
  %1029 = vmatprep.subr.bf16.mxu0 0
  %1030 = vmatpush1.bf16.msra.mxu0 %v798
  %1031 = vmatprep.subr.bf16.mxu0 0
  %1032 = vmatpush1.bf16.msra.mxu0 %v799
  %1033 = vmatprep.subr.bf16.mxu0 0
  %1034 = vmatpush1.bf16.msra.mxu0 %v800
  %1035 = vmatprep.subr.bf16.mxu0 0
  %1036 = vmatpush1.bf16.msra.mxu0 %v801
  %1037 = vmatprep.subr.bf16.mxu0 0
  %1038 = vmatpush1.bf16.msra.mxu0 %v802
  %1039 = vmatprep.subr.bf16.mxu0 0
  %1040 = vmatpush1.bf16.msra.mxu0 %v803
  %1041 = vmatprep.subr.bf16.mxu0 0
  %1042 = vmatpush1.bf16.msra.mxu0 %v804
  %1043 = vmatprep.subr.bf16.mxu0 0
  %1044 = vmatpush1.bf16.msra.mxu0 %v805
  %1045 = vmatprep.subr.bf16.mxu0 0
  %1046 = vmatpush1.bf16.msra.mxu0 %v806
  %1047 = vmatprep.subr.bf16.mxu0 0
  %1048 = vmatpush1.bf16.msra.mxu0 %v807
  %1049 = vmatprep.subr.bf16.mxu0 0
  %1050 = vmatpush1.bf16.msra.mxu0 %v808
  %1051 = vmatprep.subr.bf16.mxu0 0
  %1052 = vmatpush1.bf16.msra.mxu0 %v809
  %1053 = vmatprep.subr.bf16.mxu0 0
  %1054 = vmatpush1.bf16.msra.mxu0 %v810
  %1055 = vmatprep.subr.bf16.mxu0 0
  %1056 = vmatpush1.bf16.msra.mxu0 %v811
  %1057 = vmatprep.mubr.bf16.mxu0 %v288
  %1058 = vmatmul.mubr.bf16.gmra.mrb[0].mxu0 %v287
  %v1059 = vpop.f32.mrb[0].mxu0
  %v1060 = vadd.f32 %v1019, %v1059
  %v1061 = vpop.f32.mrb[0].mxu0
  %v1062 = vpop.f32.mrb[0].mxu0
  %v1063 = vadd.f32 %v1022, %v1062
  %v1064 = vpop.f32.mrb[0].mxu0
  %1065 = vdwg.mxu0
  %1066 = vmatprep.subr.bf16.mxu0 0
  %1067 = vmatpush1.bf16.msra.mxu0 %v812
  %1068 = vmatprep.subr.bf16.mxu0 0
  %1069 = vmatpush1.bf16.msra.mxu0 %v813
  %1070 = vmatprep.subr.bf16.mxu0 0
  %1071 = vmatpush1.bf16.msra.mxu0 %v814
  %1072 = vmatprep.subr.bf16.mxu0 0
  %1073 = vmatpush1.bf16.msra.mxu0 %v815
  %1074 = vmatprep.subr.bf16.mxu0 0
  %1075 = vmatpush1.bf16.msra.mxu0 %v816
  %1076 = vmatprep.subr.bf16.mxu0 0
  %1077 = vmatpush1.bf16.msra.mxu0 %v817
  %1078 = vmatprep.subr.bf16.mxu0 0
  %1079 = vmatpush1.bf16.msra.mxu0 %v818
  %1080 = vmatprep.subr.bf16.mxu0 0
  %1081 = vmatpush1.bf16.msra.mxu0 %v819
  %1082 = vmatprep.subr.bf16.mxu0 0
  %1083 = vmatpush1.bf16.msra.mxu0 %v820
  %1084 = vmatprep.subr.bf16.mxu0 0
  %1085 = vmatpush1.bf16.msra.mxu0 %v821
  %1086 = vmatprep.subr.bf16.mxu0 0
  %1087 = vmatpush1.bf16.msra.mxu0 %v822
  %1088 = vmatprep.subr.bf16.mxu0 0
  %1089 = vmatpush1.bf16.msra.mxu0 0
  %1090 = vmatprep.subr.bf16.mxu0 0
  %1091 = vmatpush1.bf16.msra.mxu0 0
  %1092 = vmatprep.subr.bf16.mxu0 0
  %1093 = vmatpush1.bf16.msra.mxu0 0
  %1094 = vmatprep.subr.bf16.mxu0 0
  %1095 = vmatpush1.bf16.msra.mxu0 0
  %1096 = vmatprep.subr.bf16.mxu0 0
  %1097 = vmatpush1.bf16.msra.mxu0 0
  %1098 = vmatprep.mubr.bf16.mxu0 %v900
  %1099 = vmatmul.mubr.bf16.gmra.mrb[0].mxu0 %v289
  %v1100 = vpop.f32.mrb[0].mxu0
  %v1101 = vadd.f32 %v1060, %v1100
  %v1102 = vpop.f32.mrb[0].mxu0
  %v1103 = vpop.f32.mrb[0].mxu0
  %v1104 = vadd.f32 %v1063, %v1103
  %v1105 = vpop.f32.mrb[0].mxu0
  %1106 = vdwg.mxu0
  %v1107 = vlaneseq
  %v1108 = vand.u32 %v1107, 127
  %vm1109 = vcmp.lt.s32.totalorder %v1108, 12
  %v1110 = vsel %vm1109, %v1101, -inf
  %v1111 = vsel %vm1109, %v1104, -inf
  %v1112 = vsel %vm1109, %v1101, inf
  %v1113 = vsel %vm1109, %v1104, inf
  %1114 = vmax.xlane.f32.xlu0 %v1110
  %v1115 = vpop.xlane.xlu0 %1114
  %1116 = vmax.xlane.f32.xlu0 %v1111
  %v1117 = vpop.xlane.xlu0 %1116
  %vm1118 = vcmp.eq.f32.partialorder %v1110, %v1115
  %vm1119 = vcmp.eq.f32.partialorder %v1111, %v1117
  %v1120 = vsel %vm1118, %v1108, 128
  %v1121 = vsel %vm1119, %v1108, 128
  %v1122 = vand.u32 %v1120, 65535
  %v1123 = vshra.s32 %v1120, 16
  %v1124 = vcvt.s32.f32 %v1122
  %v1125 = vcvt.s32.f32 %v1123
  %1126 = vmin.xlane.f32.xlu0 %v1125
  %v1127 = vpop.xlane.xlu0 %1126
  %vm1128 = vcmp.eq.f32.partialorder %v1125, %v1127
  %v1129 = vsel %vm1128, %v1124, inf
  %1130 = vmin.xlane.f32.xlu0 %v1129
  %v1131 = vpop.xlane.xlu0 %1130
  %v1132 = vcvt.f32.s32 %v1131
  %v1133 = vcvt.f32.s32 %v1127
  %v1134 = vshll.u32 %v1133, 16
  %v1135 = vadd.s32 %v1134, %v1132
  %v1136 = vand.u32 %v1121, 65535
  %v1137 = vshra.s32 %v1121, 16
  %v1138 = vcvt.s32.f32 %v1136
  %v1139 = vcvt.s32.f32 %v1137
  %1140 = vmin.xlane.f32.xlu0 %v1139
  %v1141 = vpop.xlane.xlu0 %1140
  %vm1142 = vcmp.eq.f32.partialorder %v1139, %v1141
  %v1143 = vsel %vm1142, %v1138, inf
  %1144 = vmin.xlane.f32.xlu0 %v1143
  %v1145 = vpop.xlane.xlu0 %1144
  %v1146 = vcvt.f32.s32 %v1145
  %v1147 = vcvt.f32.s32 %v1141
  %v1148 = vshll.u32 %v1147, 16
  %v1149 = vadd.s32 %v1148, %v1146
  %vm1150 = vcmp.eq.s32.totalorder %v1108, %v1135
  %vm1151 = vcmp.eq.s32.totalorder %v1108, %v1149
  %v1152 = vsel %vm1150, -inf, %v1110
  %v1153 = vsel %vm1151, -inf, %v1111
  %1154 = vmax.xlane.f32.xlu0 %v1152
  %v1155 = vpop.xlane.xlu0 %1154
  %1156 = vmax.xlane.f32.xlu0 %v1153
  %v1157 = vpop.xlane.xlu0 %1156
  %1158 = vmin.xlane.f32.xlu0 %v1112
  %v1159 = vpop.xlane.xlu0 %1158
  %1160 = vmin.xlane.f32.xlu0 %v1113
  %v1161 = vpop.xlane.xlu0 %1160
  %vm1162 = vcmp.eq.f32.partialorder %v1112, %v1159
  %vm1163 = vcmp.eq.f32.partialorder %v1113, %v1161
  %v1164 = vsel %vm1162, %v1108, 128
  %v1165 = vsel %vm1163, %v1108, 128
  %v1166 = vand.u32 %v1164, 65535
  %v1167 = vshra.s32 %v1164, 16
  %v1168 = vcvt.s32.f32 %v1166
  %v1169 = vcvt.s32.f32 %v1167
  %1170 = vmin.xlane.f32.xlu0 %v1169
  %v1171 = vpop.xlane.xlu0 %1170
  %vm1172 = vcmp.eq.f32.partialorder %v1169, %v1171
  %v1173 = vsel %vm1172, %v1168, inf
  %1174 = vmin.xlane.f32.xlu0 %v1173
  %v1175 = vpop.xlane.xlu0 %1174
  %v1176 = vcvt.f32.s32 %v1175
  %v1177 = vcvt.f32.s32 %v1171
  %v1178 = vshll.u32 %v1177, 16
  %v1179 = vadd.s32 %v1178, %v1176
  %v1180 = vand.u32 %v1165, 65535
  %v1181 = vshra.s32 %v1165, 16
  %v1182 = vcvt.s32.f32 %v1180
  %v1183 = vcvt.s32.f32 %v1181
  %1184 = vmin.xlane.f32.xlu0 %v1183
  %v1185 = vpop.xlane.xlu0 %1184
  %vm1186 = vcmp.eq.f32.partialorder %v1183, %v1185
  %v1187 = vsel %vm1186, %v1182, inf
  %1188 = vmin.xlane.f32.xlu0 %v1187
  %v1189 = vpop.xlane.xlu0 %1188
  %v1190 = vcvt.f32.s32 %v1189
  %v1191 = vcvt.f32.s32 %v1185
  %v1192 = vshll.u32 %v1191, 16
  %v1193 = vadd.s32 %v1192, %v1190
  %vm1194 = vcmp.eq.s32.totalorder %v1108, %v1179
  %vm1195 = vcmp.eq.s32.totalorder %v1108, %v1193
  %v1196 = vsel %vm1194, inf, %v1112
  %v1197 = vsel %vm1195, inf, %v1113
  %1198 = vmin.xlane.f32.xlu0 %v1196
  %v1199 = vpop.xlane.xlu0 %1198
  %1200 = vmin.xlane.f32.xlu0 %v1197
  %v1201 = vpop.xlane.xlu0 %1200
  %v1202 = vld [vmem:[%s3] ss:$4 sm:$0x3]
  %v1204 = vlaneseq
  %v1205 = vshrl.u32 %v1204, 7
  %v1206 = vsub.s32 0, %v1205
  %v1207 = vrot.slane %v1202, %v1206
  %v1208 = vlaneseq
  %v1209 = vshrl.u32 %v1208, 7
  %v1210 = vsub.s32 1, %v1209
  %v1211 = vrot.slane %v1202, %v1210
  %v1214 = vmul.f32 %v1115, %v1207
  %v1215 = vmul.f32 %v1115, %v1211
  %v1216 = vmul.f32 %v1117, %v1207
  %v1217 = vmul.f32 %v1117, %v1211
  %s1218 = scalar_lea.vmem %s3, 1
  %v1219 = vld [vmem:[%s1218] ss:$4 sm:$0x3]
  %v1221 = vlaneseq
  %v1222 = vshrl.u32 %v1221, 7
  %v1223 = vsub.s32 0, %v1222
  %v1224 = vrot.slane %v1219, %v1223
  %v1225 = vlaneseq
  %v1226 = vshrl.u32 %v1225, 7
  %v1227 = vsub.s32 1, %v1226
  %v1228 = vrot.slane %v1219, %v1227
  %v1231 = vmul.f32 %v1155, %v1224
  %v1232 = vmul.f32 %v1155, %v1228
  %v1233 = vmul.f32 %v1157, %v1224
  %v1234 = vmul.f32 %v1157, %v1228
  %v1235 = vadd.f32 %v1214, %v1231
  %v1236 = vadd.f32 %v1215, %v1232
  %v1237 = vadd.f32 %v1216, %v1233
  %v1238 = vadd.f32 %v1217, %v1234
  %s1239 = scalar_lea.vmem %s3, 2
  %v1240 = vld [vmem:[%s1239] ss:$4 sm:$0x3]
  %v1242 = vlaneseq
  %v1243 = vshrl.u32 %v1242, 7
  %v1244 = vsub.s32 0, %v1243
  %v1245 = vrot.slane %v1240, %v1244
  %v1246 = vlaneseq
  %v1247 = vshrl.u32 %v1246, 7
  %v1248 = vsub.s32 1, %v1247
  %v1249 = vrot.slane %v1240, %v1248
  %v1252 = vmul.f32 %v1199, %v1245
  %v1253 = vmul.f32 %v1199, %v1249
  %v1254 = vmul.f32 %v1201, %v1245
  %v1255 = vmul.f32 %v1201, %v1249
  %v1256 = vadd.f32 %v1235, %v1252
  %v1257 = vadd.f32 %v1236, %v1253
  %v1258 = vadd.f32 %v1237, %v1254
  %v1259 = vadd.f32 %v1238, %v1255
  %s1260 = scalar_lea.vmem %s3, 3
  %v1261 = vld [vmem:[%s1260] ss:$4 sm:$0x3]
  %v1263 = vlaneseq
  %v1264 = vshrl.u32 %v1263, 7
  %v1265 = vsub.s32 0, %v1264
  %v1266 = vrot.slane %v1261, %v1265
  %v1267 = vlaneseq
  %v1268 = vshrl.u32 %v1267, 7
  %v1269 = vsub.s32 1, %v1268
  %v1270 = vrot.slane %v1261, %v1269
  %v1273 = vmul.f32 %v1159, %v1266
  %v1274 = vmul.f32 %v1159, %v1270
  %v1275 = vmul.f32 %v1161, %v1266
  %v1276 = vmul.f32 %v1161, %v1270
  %v1277 = vadd.f32 %v1256, %v1273
  %v1278 = vadd.f32 %v1257, %v1274
  %v1279 = vadd.f32 %v1258, %v1275
  %v1280 = vadd.f32 %v1259, %v1276
  %v1281 = vld [vmem:[%s4] sm:$0x3]
  %v1283 = vlaneseq
  %v1284 = vshrl.u32 %v1283, 7
  %v1285 = vsub.s32 0, %v1284
  %v1286 = vrot.slane %v1281, %v1285
  %v1287 = vlaneseq
  %v1288 = vshrl.u32 %v1287, 7
  %v1289 = vsub.s32 1, %v1288
  %v1290 = vrot.slane %v1281, %v1289
  %v1293 = vadd.f32 %v1277, %v1286
  %v1294 = vadd.f32 %v1278, %v1290
  %v1295 = vadd.f32 %v1279, %v1286
  %v1296 = vadd.f32 %v1280, %v1290
  %v1297 = vmax.f32 %v1293, 0.0
  %v1298 = vmax.f32 %v1294, 0.0
  %v1299 = vmax.f32 %v1295, 0.0
  %v1300 = vmax.f32 %v1296, 0.0
  %v1301 = vpack.c.bf16 %v1299, %v1297
  %v1302 = vpack.c.bf16 %v1300, %v1298
  %v1303 = vld [vmem:[%s5] sm:$0xf]
  %v1304 = vld [vmem:[%s5 + $0x4] sm:$0xf]
  %v1305 = vld [vmem:[%s5 + $0x8] sm:$0xf]
  %v1306 = vld [vmem:[%s5 + $0xc] sm:$0xf]
  %v1307 = vld [vmem:[%s5 + $0x10] sm:$0xf]
  %v1308 = vld [vmem:[%s5 + $0x14] sm:$0xf]
  %v1309 = vld [vmem:[%s5 + $0x18] sm:$0xf]
  %v1310 = vld [vmem:[%s5 + $0x1c] sm:$0xf]
  %v1311 = vld [vmem:[%s5 + $0x20] sm:$0xf]
  %v1312 = vld [vmem:[%s5 + $0x24] sm:$0xf]
  %v1313 = vld [vmem:[%s5 + $0x28] sm:$0xf]
  %v1314 = vld [vmem:[%s5 + $0x2c] sm:$0xf]
  %v1315 = vld [vmem:[%s5 + $0x30] sm:$0xf]
  %v1316 = vld [vmem:[%s5 + $0x34] sm:$0xf]
  %v1317 = vld [vmem:[%s5 + $0x38] sm:$0xf]
  %v1318 = vld [vmem:[%s5 + $0x3c] sm:$0xf]
  %v1319 = vld [vmem:[%s5 + $0x40] sm:$0xf]
  %v1320 = vld [vmem:[%s5 + $0x44] sm:$0xf]
  %v1321 = vld [vmem:[%s5 + $0x48] sm:$0xf]
  %v1322 = vld [vmem:[%s5 + $0x4c] sm:$0xf]
  %v1323 = vld [vmem:[%s5 + $0x50] sm:$0xf]
  %v1324 = vld [vmem:[%s5 + $0x54] sm:$0xf]
  %v1325 = vld [vmem:[%s5 + $0x58] sm:$0xf]
  %v1326 = vld [vmem:[%s5 + $0x5c] sm:$0xf]
  %v1327 = vld [vmem:[%s5 + $0x60] sm:$0xf]
  %v1328 = vld [vmem:[%s6] sm:$0x1]
  %v1330 = vlaneseq
  %v1331 = vshrl.u32 %v1330, 7
  %v1332 = vsub.s32 0, %v1331
  %v1333 = vrot.slane %v1328, %v1332
  %v1360 = vunpack.c.l.b16 %v1303
  %v1361 = vunpack.c.l.b16 %v1304
  %v1362 = vunpack.c.l.b16 %v1305
  %v1363 = vunpack.c.l.b16 %v1306
  %v1364 = vunpack.c.l.b16 %v1307
  %v1365 = vunpack.c.l.b16 %v1308
  %v1366 = vunpack.c.l.b16 %v1309
  %v1367 = vunpack.c.l.b16 %v1310
  %v1368 = vunpack.c.l.b16 %v1311
  %v1369 = vunpack.c.l.b16 %v1312
  %v1370 = vunpack.c.l.b16 %v1313
  %v1371 = vunpack.c.l.b16 %v1314
  %v1372 = vunpack.c.l.b16 %v1315
  %v1373 = vunpack.c.l.b16 %v1316
  %v1374 = vunpack.c.l.b16 %v1317
  %v1375 = vunpack.c.l.b16 %v1318
  %v1376 = vunpack.c.l.b16 %v1319
  %v1377 = vunpack.c.l.b16 %v1320
  %v1378 = vunpack.c.l.b16 %v1321
  %v1379 = vunpack.c.l.b16 %v1322
  %v1380 = vunpack.c.l.b16 %v1323
  %v1381 = vunpack.c.l.b16 %v1324
  %v1382 = vunpack.c.l.b16 %v1325
  %v1383 = vunpack.c.l.b16 %v1326
  %v1384 = vunpack.c.l.b16 %v1327
  %v1385 = vpack.c.b16 %v1361, %v1360
  %v1386 = vpack.c.b16 %v1363, %v1362
  %v1387 = vpack.c.b16 %v1365, %v1364
  %v1388 = vpack.c.b16 %v1367, %v1366
  %v1389 = vpack.c.b16 %v1369, %v1368
  %v1390 = vpack.c.b16 %v1371, %v1370
  %v1391 = vpack.c.b16 %v1373, %v1372
  %v1392 = vpack.c.b16 %v1375, %v1374
  %v1393 = vpack.c.b16 %v1377, %v1376
  %v1394 = vpack.c.b16 %v1379, %v1378
  %v1395 = vpack.c.b16 %v1381, %v1380
  %v1396 = vpack.c.b16 %v1383, %v1382
  %v1397 = vpack.c.b16 %v1384, %v1384
  %vm1410 = vcmask 588800
  %v1412 = vsel %vm1410, %v1302, 0
  %vm1414 = vcmask 1043456
  %v1416 = vsel %vm1414, %v1397, 0
  %1418 = vmatprep.subr.bf16.mxu0 0
  %1419 = vmatpush1.bf16.msra.mxu0 %v1385
  %1420 = vmatprep.subr.bf16.mxu0 0
  %1421 = vmatpush1.bf16.msra.mxu0 %v1386
  %1422 = vmatprep.subr.bf16.mxu0 0
  %1423 = vmatpush1.bf16.msra.mxu0 %v1387
  %1424 = vmatprep.subr.bf16.mxu0 0
  %1425 = vmatpush1.bf16.msra.mxu0 %v1388
  %1426 = vmatprep.subr.bf16.mxu0 0
  %1427 = vmatpush1.bf16.msra.mxu0 %v1389
  %1428 = vmatprep.subr.bf16.mxu0 0
  %1429 = vmatpush1.bf16.msra.mxu0 %v1390
  %1430 = vmatprep.subr.bf16.mxu0 0
  %1431 = vmatpush1.bf16.msra.mxu0 %v1391
  %1432 = vmatprep.subr.bf16.mxu0 0
  %1433 = vmatpush1.bf16.msra.mxu0 %v1392
  %1434 = vmatprep.subr.bf16.mxu0 0
  %1435 = vmatpush1.bf16.msra.mxu0 %v1393
  %1436 = vmatprep.subr.bf16.mxu0 0
  %1437 = vmatpush1.bf16.msra.mxu0 %v1394
  %1438 = vmatprep.subr.bf16.mxu0 0
  %1439 = vmatpush1.bf16.msra.mxu0 %v1395
  %1440 = vmatprep.subr.bf16.mxu0 0
  %1441 = vmatpush1.bf16.msra.mxu0 %v1396
  %1442 = vmatprep.subr.bf16.mxu0 0
  %1443 = vmatpush1.bf16.msra.mxu0 %v1416
  %1444 = vmatprep.subr.bf16.mxu0 0
  %1445 = vmatpush1.bf16.msra.mxu0 0
  %1446 = vmatprep.subr.bf16.mxu0 0
  %1447 = vmatpush1.bf16.msra.mxu0 0
  %1448 = vmatprep.subr.bf16.mxu0 0
  %1449 = vmatpush1.bf16.msra.mxu0 0
  %1450 = vmatprep.mubr.bf16.mxu0 %v1412
  %1451 = vmatmul.mubr.bf16.gmra.mrb[0].mxu0 %v1301
  %v1452 = vpop.f32.mrb[0].mxu0
  %v1453 = vadd.f32 %v1333, %v1452
  %v1454 = vpop.f32.mrb[0].mxu0
  %v1455 = vpop.f32.mrb[0].mxu0
  %v1456 = vadd.f32 %v1333, %v1455
  %v1457 = vpop.f32.mrb[0].mxu0
  %1458 = vdwg.mxu0
  %v1459 = vmax.f32 %v1453, 0.0
  %v1460 = vmax.f32 %v1456, 0.0
  %v1461 = vpack.c.bf16 %v1460, %v1459
  %v1462 = vld [vmem:[%s7] sm:$0xf]
  %v1463 = vld [vmem:[%s7 + $0x4] sm:$0xf]
  %v1464 = vld [vmem:[%s7 + $0x8] sm:$0xf]
  %v1465 = vld [vmem:[%s7 + $0xc] sm:$0xf]
  %v1466 = vld [vmem:[%s7 + $0x10] sm:$0xf]
  %v1467 = vld [vmem:[%s7 + $0x14] sm:$0xf]
  %v1468 = vld [vmem:[%s7 + $0x18] sm:$0xf]
  %v1469 = vld [vmem:[%s7 + $0x1c] sm:$0xf]
  %v1470 = vld [vmem:[%s7 + $0x20] sm:$0xf]
  %v1471 = vld [vmem:[%s7 + $0x24] sm:$0xf]
  %v1472 = vld [vmem:[%s7 + $0x28] sm:$0xf]
  %v1473 = vld [vmem:[%s7 + $0x2c] sm:$0xf]
  %v1474 = vld [vmem:[%s7 + $0x30] sm:$0x3]
  %v1475 = vld [vmem:[%s8] sm:$0x1]
  %v1477 = vlaneseq
  %v1478 = vshrl.u32 %v1477, 7
  %v1479 = vsub.s32 0, %v1478
  %v1480 = vrot.slane %v1475, %v1479
  %v1495 = vunpack.c.l.b16 %v1462
  %v1496 = vunpack.c.l.b16 %v1463
  %v1497 = vunpack.c.l.b16 %v1464
  %v1498 = vunpack.c.l.b16 %v1465
  %v1499 = vunpack.c.l.b16 %v1466
  %v1500 = vunpack.c.l.b16 %v1467
  %v1501 = vunpack.c.l.b16 %v1468
  %v1502 = vunpack.c.l.b16 %v1469
  %v1503 = vunpack.c.l.b16 %v1470
  %v1504 = vunpack.c.l.b16 %v1471
  %v1505 = vunpack.c.l.b16 %v1472
  %v1506 = vunpack.c.l.b16 %v1473
  %v1507 = vunpack.c.l.b16 %v1474
  %v1508 = vpack.c.b16 %v1496, %v1495
  %v1509 = vpack.c.b16 %v1498, %v1497
  %v1510 = vpack.c.b16 %v1500, %v1499
  %v1511 = vpack.c.b16 %v1502, %v1501
  %v1512 = vpack.c.b16 %v1504, %v1503
  %v1513 = vpack.c.b16 %v1506, %v1505
  %v1514 = vpack.c.b16 %v1507, %v1507
  %vm1521 = vcmask 818176
  %v1523 = vsel %vm1521, %v1461, 0
  %vm1525 = vcmask 1041408
  %v1527 = vsel %vm1525, %v1514, 0
  %1529 = vmatprep.subr.bf16.mxu0 0
  %1530 = vmatpush1.bf16.msra.mxu0 %v1508
  %1531 = vmatprep.subr.bf16.mxu0 0
  %1532 = vmatpush1.bf16.msra.mxu0 %v1509
  %1533 = vmatprep.subr.bf16.mxu0 0
  %1534 = vmatpush1.bf16.msra.mxu0 %v1510
  %1535 = vmatprep.subr.bf16.mxu0 0
  %1536 = vmatpush1.bf16.msra.mxu0 %v1511
  %1537 = vmatprep.subr.bf16.mxu0 0
  %1538 = vmatpush1.bf16.msra.mxu0 %v1512
  %1539 = vmatprep.subr.bf16.mxu0 0
  %1540 = vmatpush1.bf16.msra.mxu0 %v1513
  %1541 = vmatprep.subr.bf16.mxu0 0
  %1542 = vmatpush1.bf16.msra.mxu0 %v1527
  %1543 = vmatprep.subr.bf16.mxu0 0
  %1544 = vmatpush1.bf16.msra.mxu0 0
  %1545 = vmatprep.subr.bf16.mxu0 0
  %1546 = vmatpush1.bf16.msra.mxu0 0
  %1547 = vmatprep.subr.bf16.mxu0 0
  %1548 = vmatpush1.bf16.msra.mxu0 0
  %1549 = vmatprep.subr.bf16.mxu0 0
  %1550 = vmatpush1.bf16.msra.mxu0 0
  %1551 = vmatprep.subr.bf16.mxu0 0
  %1552 = vmatpush1.bf16.msra.mxu0 0
  %1553 = vmatprep.subr.bf16.mxu0 0
  %1554 = vmatpush1.bf16.msra.mxu0 0
  %1555 = vmatprep.subr.bf16.mxu0 0
  %1556 = vmatpush1.bf16.msra.mxu0 0
  %1557 = vmatprep.subr.bf16.mxu0 0
  %1558 = vmatpush1.bf16.msra.mxu0 0
  %1559 = vmatprep.subr.bf16.mxu0 0
  %1560 = vmatpush1.bf16.msra.mxu0 0
  %1561 = vmatprep.mubr.bf16.mxu0 0
  %1562 = vmatmul.mubr.bf16.gmra.mrb[0].mxu0 %v1523
  %v1563 = vpop.f32.mrb[0].mxu0
  %v1564 = vadd.f32 %v1480, %v1563
  %v1565 = vpop.f32.mrb[0].mxu0
  %v1566 = vpop.f32.mrb[0].mxu0
  %v1567 = vadd.f32 %v1480, %v1566
  %v1568 = vpop.f32.mrb[0].mxu0
  %1569 = vdwg.mxu0
  %v1570 = vpack.c.bf16 %v1567, %v1564
  %v1572 = vunpack.c.l.b16 %v1570
  %v1573 = vunpack.c.h.b16 %v1570
  %v1574 = vpack.c.b16 %v1572, %v1572
  %v1575 = vpack.c.b16 %v1573, %v1573
  %1578 = vst [vmem:[%s9] sm:$0xf] %v1574
  %1579 = vst [vmem:[%s9 + $0x4] sm:$0xf] %v1575
  // Predicated region
  $region38: #{model_forward.1} parent=0 // pred_check
    _
  $region39: #{model_forward.1} parent=0 // pred_check_branch
    %1581 = sbr.rel (0) target = $region41
  $region40: #{model_forward.1} parent=0 // pred_region
    _
  $region41: #{model_forward.1} parent=0 // pred_fallthru
    _
  // Predicated region
  $region42: #{model_forward.1} parent=0 // pred_check
    _
  $region43: #{model_forward.1} parent=0 // pred_check_branch
    %1583 = sbr.rel (0) target = $region45
  $region44: #{model_forward.1} parent=0 // pred_region
    _
  $region45: #{model_forward.1} parent=0 // pred_fallthru
    _

</llo_original>
